<compile_context>
chip_gen: v7x
topology: tpu7x:2x2x1
jax: 0.10.0
libtpu: 0.0.40
codegen_flags: <defaults>
</compile_context>

<pallas_src>
import jax
import jax.numpy as jnp
from jax.experimental import pallas as pl
from jax.experimental.pallas import tpu as pltpu

MAX_LENGTH = 10
L = 128            # TPU lane width; every logical segment gets one 128-lane slot
NEG = -1e30        # softmax mask value, folded into bias pad lanes at pack time


# ---------------------------------------------------------------------------
# Kernel
# ---------------------------------------------------------------------------
def attn_decoder_kernel(emb_ref, hid0_ref, enc_ref, w1_ref, wca_ref,
                        wih_ref, wout_ref, b_ref, out_ref):
    """Runs all T decode steps in a single invocation (no grid).

    emb_ref : (T, 128)   bf16  pre-gathered embedding rows (zero pad lanes)
    hid0_ref: (1, 128)   f32   initial hidden state (zero pad lanes)
    enc_ref : (128, 128) f32   encoder outputs, zero-padded from (ML, H)
    w1_ref  : (256, 640) bf16  [emb | hid] -> [attn | comb_e | gh_r | gh_z | gh_n]
    wca_ref : (128, 128) bf16  attn_applied -> combine
    wih_ref : (128, 384) bf16  x -> [gi_r | gi_z | gi_n]
    wout_ref: (128, 128) bf16  h_new -> vocab logits
    b_ref   : (1, 1152)  f32   [b1(640) | b_ih(384) | b_out(128)]; the attention /
                               vocab pad lanes hold -1e30 (softmax masks)
    out_ref : (T, 384)   f32   per step: [logp | h_new | attn_w] in 128-lane slots
    """
    f32, bf16 = jnp.float32, jnp.bfloat16
    T = emb_ref.shape[0]

    # Loaded exactly once; resident for every step of the unrolled loop.
    w1 = w1_ref[...]
    wca = wca_ref[...]
    wih = wih_ref[...]
    wout = wout_ref[...]
    enc = enc_ref[...]
    b = b_ref[...]
    b1 = b[:, 0:5 * L]            # fused-dot bias (+ attention softmax mask)
    bih = b[:, 5 * L:8 * L]       # GRU input-gate bias
    bout = b[:, 8 * L:9 * L]      # output bias (+ log_softmax mask)

    hid = hid0_ref[...]           # (1, 128) f32, zeros in pad lanes

    # Static T -> fully unrolled loop (equivalent to fori_loop(unroll=True));
    # every slice / store below is static and 128-lane aligned.
    for t in range(T):
        emb = emb_ref[t:t + 1, :]                                    # (1, 128) bf16
        # TODO(synk): dropout(p=0.1) on the embedding is identity (eval mode).

        # Fused projection of [emb | hid]: attention logits, combine(emb) and all
        # three GRU hidden gates in ONE bf16 MXU dot.
        lhs = jnp.concatenate([emb, hid.astype(bf16)], axis=1)       # (1, 256) bf16
        fused = jnp.dot(lhs, w1, preferred_element_type=f32) + b1    # (1, 640) f32

        # --- attention softmax (pad lanes already at -1e30 via b1) ---
        a_log = fused[:, 0:L]
        m = jnp.max(a_log, axis=1, keepdims=True)
        e = jnp.exp(a_log - m)
        attn_w = e * pl.reciprocal(jnp.sum(e, axis=1, keepdims=True), approx=True)

        # --- bmm(attn_w, encoder_outputs); enc pad rows/cols are zero ---
        applied = jnp.dot(attn_w, enc, preferred_element_type=f32)   # (1, 128) f32

        # --- attn_combine(cat(emb, attn_applied)) + ReLU ---
        comb = fused[:, L:2 * L] + jnp.dot(applied.astype(bf16), wca,
                                           preferred_element_type=f32)
        x = jnp.maximum(comb, 0.0)                                   # (1, 128) f32

        # --- single-step GRU (PyTorch gate order r, z, n); gh from the fused dot ---
        gi = jnp.dot(x.astype(bf16), wih, preferred_element_type=f32) + bih
        r = jax.nn.sigmoid(gi[:, 0:L] + fused[:, 2 * L:3 * L])
        z = jax.nn.sigmoid(gi[:, L:2 * L] + fused[:, 3 * L:4 * L])
        n = jnp.tanh(gi[:, 2 * L:3 * L] + r * fused[:, 4 * L:5 * L])
        h_new = (1.0 - z) * n + z * hid                              # (1, 128) f32

        # --- output projection + log_softmax (vocab pad lanes masked via bout) ---
        logits = jnp.dot(h_new.astype(bf16), wout, preferred_element_type=f32) + bout
        m2 = jnp.max(logits, axis=1, keepdims=True)
        s = logits - m2
        logp = s - jnp.log(jnp.sum(jnp.exp(s), axis=1, keepdims=True))

        # Three unmasked, 128-lane-aligned stores into the resident output block
        # (the whole (T, 384) block is written back to HBM once, at kernel exit).
        out_ref[t:t + 1, 0:L] = logp
        out_ref[t:t + 1, L:2 * L] = h_new
        out_ref[t:t + 1, 2 * L:3 * L] = attn_w

        hid = h_new


# ---------------------------------------------------------------------------
# Parameter packing (128-lane-aligned bf16 slabs + f32 bias slab with masks)
# ---------------------------------------------------------------------------
def pack_params(p):
    V, H = p["emb"].shape
    ML = p["wa_e"].shape[1]
    assert max(H, V, ML) <= L, "this packing assumes H, V, max_length <= 128"
    f32, bf16 = jnp.float32, jnp.bfloat16

    def put(dst, r0, r1, c0, c1, blk):
        return dst.at[r0:r1, c0:c1].set(blk.astype(f32))

    # Fused [emb | hid] -> [attn | comb_e | gh_r | gh_z | gh_n], unused rows/cols zero.
    w1 = jnp.zeros((2 * L, 5 * L), f32)
    w1 = put(w1, 0, H, 0, ML, p["wa_e"])                  # emb -> attn
    w1 = put(w1, L, L + H, 0, ML, p["wa_h"])              # hid -> attn
    w1 = put(w1, 0, H, L, L + H, p["wc_e"])               # emb -> combine
    for g in range(3):                                    # hid -> GRU gates (r, z, n)
        w1 = put(w1, L, L + H, (2 + g) * L, (2 + g) * L + H,
                 p["w_hh"][:, g * H:(g + 1) * H])

    wca = jnp.zeros((L, L), f32).at[:H, :H].set(p["wc_a"].astype(f32))
    wih = jnp.zeros((L, 3 * L), f32)
    for g in range(3):
        wih = put(wih, 0, H, g * L, g * L + H, p["w_ih"][:, g * H:(g + 1) * H])
    wout = jnp.zeros((L, L), f32).at[:H, :V].set(p["w_out"].astype(f32))

    # Biases aligned with the fused-dot columns; softmax masks in the pad lanes.
    b1 = jnp.zeros((1, 5 * L), f32)
    b1 = b1.at[:, 0:L].set(NEG).at[:, 0:ML].set(p["ba"])
    b1 = b1.at[:, L:L + H].set(p["bc"])
    for g in range(3):
        b1 = b1.at[:, (2 + g) * L:(2 + g) * L + H].set(p["b_hh"][:, g * H:(g + 1) * H])
    bih = jnp.zeros((1, 3 * L), f32)
    for g in range(3):
        bih = bih.at[:, g * L:g * L + H].set(p["b_ih"][:, g * H:(g + 1) * H])
    bout = jnp.full((1, L), NEG, f32).at[:, 0:V].set(p["b_out"])

    emb_pad = jnp.zeros((V, L), f32).at[:, :H].set(p["emb"].astype(f32))

    return dict(emb_pad=emb_pad.astype(bf16),
                w1=w1.astype(bf16), wca=wca.astype(bf16),
                wih=wih.astype(bf16), wout=wout.astype(bf16),
                b_slab=jnp.concatenate([b1, bih, bout], axis=1),   # (1, 1152) f32
                dims=dict(H=H, V=V, ML=ML))


# ---------------------------------------------------------------------------
# Wrapper
# ---------------------------------------------------------------------------
def attn_decoder_forward(tokens, hidden, encoder_outputs, packed):
    """Run T teacher-forced decoder steps in ONE un-gridded pallas_call.
    T = len(tokens); T=1 reproduces AttnDecoderRNN.forward exactly.
    Returns (log_probs (T, V), final hidden (1, 1, H), attn_weights (T, ML))."""
    dims = packed["dims"]
    H, V, ML = dims["H"], dims["V"], dims["ML"]

    tokens = jnp.atleast_1d(jnp.asarray(tokens, jnp.int32))
    toks = jnp.clip(tokens, 0, V - 1)                  # guard gather against OOB ids
    T = int(toks.shape[0])

    emb_rows = jnp.take(packed["emb_pad"], toks, axis=0)               # (T, 128) bf16
    hid0 = jnp.pad(hidden.reshape(1, H).astype(jnp.float32), ((0, 0), (0, L - H)))
    enc_pad = jnp.pad(encoder_outputs.astype(jnp.float32),
                      ((0, L - ML), (0, L - H)))                        # (128, 128) f32

    vmem = pl.BlockSpec(memory_space=pltpu.MemorySpace.VMEM)
    out = pl.pallas_call(
        attn_decoder_kernel,
        out_shape=jax.ShapeDtypeStruct((T, 3 * L), jnp.float32),
        in_specs=[vmem] * 8,
        out_specs=vmem,
    )(emb_rows, hid0, enc_pad, packed["w1"], packed["wca"],
      packed["wih"], packed["wout"], packed["b_slab"])

    logp = out[:, :V]
    h_final = out[T - 1, L:L + H].reshape(1, 1, H)
    attn_w = out[:, 2 * L:2 * L + ML]
    return logp, h_final, attn_w


# ---------------------------------------------------------------------------
# Parameters + pure-JAX reference (PyTorch semantics, eval mode)
# ---------------------------------------------------------------------------
def init_params(key, hidden_size, output_size, max_length=MAX_LENGTH):
    """PyTorch-layout params; linear weights stored [in, out] (pre-transposed).
    Matmul weights in bf16 (native MXU path), biases in f32."""
    H, V, ML = hidden_size, output_size, max_length
    ks = jax.random.split(key, 11)
    bf16 = jnp.bfloat16

    def u(k, shape, fan_in):
        b = 1.0 / (fan_in ** 0.5)
        return jax.random.uniform(k, shape, jnp.float32, -b, b)

    emb = jax.random.normal(ks[0], (V, H), jnp.float32).astype(bf16)   # nn.Embedding ~ N(0,1)
    w_attn = u(ks[1], (2 * H, ML), 2 * H).astype(bf16)                 # Linear(2H -> ML)
    b_attn = u(ks[2], (1, ML), 2 * H)
    w_comb = u(ks[3], (2 * H, H), 2 * H).astype(bf16)                  # Linear(2H -> H)
    b_comb = u(ks[4], (1, H), 2 * H)
    w_ih = u(ks[5], (H, 3 * H), H).astype(bf16)                        # GRU weight_ih^T (r|z|n)
    b_ih = u(ks[6], (1, 3 * H), H)
    w_hh = u(ks[7], (H, 3 * H), H).astype(bf16)                        # GRU weight_hh^T (r|z|n)
    b_hh = u(ks[8], (1, 3 * H), H)
    w_out = u(ks[9], (H, V), H).astype(bf16)                           # Linear(H -> V)
    b_out = u(ks[10], (1, V), H)

    return dict(emb=emb,
                wa_e=w_attn[:H], wa_h=w_attn[H:], ba=b_attn,
                wc_e=w_comb[:H], wc_a=w_comb[H:], bc=b_comb,
                w_ih=w_ih, b_ih=b_ih, w_hh=w_hh, b_hh=b_hh,
                w_out=w_out, b_out=b_out)


def reference_step(token, hidden, enc, p):
    """Pure-JAX single decoder step matching PyTorch forward (eval mode), f32 math."""
    H = hidden.shape[-1]
    f32 = lambda a: a.astype(jnp.float32)
    emb = f32(p["emb"][token]).reshape(1, H)
    hid = hidden.reshape(1, H).astype(jnp.float32)
    aw = jax.nn.softmax(emb @ f32(p["wa_e"]) + hid @ f32(p["wa_h"]) + p["ba"], axis=1)
    applied = aw @ enc
    x = jax.nn.relu(emb @ f32(p["wc_e"]) + applied @ f32(p["wc_a"]) + p["bc"])
    gi = x @ f32(p["w_ih"]) + p["b_ih"]
    gh = hid @ f32(p["w_hh"]) + p["b_hh"]
    r = jax.nn.sigmoid(gi[:, :H] + gh[:, :H])
    z = jax.nn.sigmoid(gi[:, H:2 * H] + gh[:, H:2 * H])
    n = jnp.tanh(gi[:, 2 * H:] + r * gh[:, 2 * H:])
    h_new = (1.0 - z) * n + z * hid
    logp = jax.nn.log_softmax(h_new @ f32(p["w_out"]) + p["b_out"], axis=1)
    return logp, h_new.reshape(1, 1, H), aw


if __name__ == "__main__":
    H, V, ML = 32, 20, MAX_LENGTH
    key = jax.random.PRNGKey(0)
    kp, kh, ke, kt = jax.random.split(key, 4)

    params = init_params(kp, H, V, ML)
    packed = pack_params(params)

    hidden = jax.random.normal(kh, (1, 1, H), jnp.float32)
    encoder_outputs = jax.random.normal(ke, (ML, H), jnp.float32)

    # headroom for the bf16 MXU path (bf16 weights + bf16 LHS) and the EUP
    # approximate reciprocal in the attention softmax
    tol = dict(atol=5e-3, rtol=5e-3)

    # --- single step: exact AttnDecoderRNN.forward semantics ---
    token = jnp.array([3], jnp.int32)
    logp, h_new, attn_w = jax.block_until_ready(
        attn_decoder_forward(token, hidden, encoder_outputs, packed))
    r_logp, r_h, r_aw = reference_step(3, hidden, encoder_outputs, params)
    assert logp.shape == (1, V) and h_new.shape == (1, 1, H) and attn_w.shape == (1, ML)
    assert jnp.allclose(logp, r_logp, **tol)
    assert jnp.allclose(h_new, r_h, **tol)
    assert jnp.allclose(attn_w, r_aw, **tol)

    # --- 4-step teacher-forced decode in ONE un-gridded pallas_call ---
    T = 4
    tokens = jax.random.randint(kt, (T,), 0, V, dtype=jnp.int32)
    logp_t, h_T, aw_t = jax.block_until_ready(
        attn_decoder_forward(tokens, hidden, encoder_outputs, packed))
    assert logp_t.shape == (T, V) and aw_t.shape == (T, ML) and h_T.shape == (1, 1, H)
    h_ref = hidden
    for s in range(T):
        r_logp, h_ref, r_aw = reference_step(int(tokens[s]), h_ref, encoder_outputs, params)
        assert jnp.allclose(logp_t[s:s + 1], r_logp, **tol), f"logp mismatch at step {s}"
        assert jnp.allclose(aw_t[s:s + 1], r_aw, **tol), f"attn mismatch at step {s}"
    assert jnp.allclose(h_T, h_ref, **tol)

    print("KERNEL_OK")
</pallas_src>

<mosaic_0001>
module attributes {stable_mosaic.version = 11 : i64} {
  func.func @attn_decoder_kernel(%arg0: memref<1x128xbf16, #tpu.memory_space<vmem>>, %arg1: memref<1x128xf32, #tpu.memory_space<vmem>>, %arg2: memref<128x128xf32, #tpu.memory_space<vmem>>, %arg3: memref<256x640xbf16, #tpu.memory_space<vmem>>, %arg4: memref<128x128xbf16, #tpu.memory_space<vmem>>, %arg5: memref<128x384xbf16, #tpu.memory_space<vmem>>, %arg6: memref<128x128xbf16, #tpu.memory_space<vmem>>, %arg7: memref<1x1152xf32, #tpu.memory_space<vmem>>, %arg8: memref<1x384xf32, #tpu.memory_space<vmem>>) attributes {dimension_semantics = [], scalar_prefetch = 0 : i64, scratch_operands = 0 : i64, tpu.core_type = #tpu.core_type<tc>} {
    %c0 = arith.constant 0 : index
    %c0_0 = arith.constant 0 : index
    %0 = vector.load %arg3[%c0, %c0_0] : memref<256x640xbf16, #tpu.memory_space<vmem>>, vector<256x640xbf16>
    %c0_1 = arith.constant 0 : index
    %c0_2 = arith.constant 0 : index
    %1 = vector.load %arg4[%c0_1, %c0_2] : memref<128x128xbf16, #tpu.memory_space<vmem>>, vector<128x128xbf16>
    %c0_3 = arith.constant 0 : index
    %c0_4 = arith.constant 0 : index
    %2 = vector.load %arg5[%c0_3, %c0_4] : memref<128x384xbf16, #tpu.memory_space<vmem>>, vector<128x384xbf16>
    %c0_5 = arith.constant 0 : index
    %c0_6 = arith.constant 0 : index
    %3 = vector.load %arg6[%c0_5, %c0_6] : memref<128x128xbf16, #tpu.memory_space<vmem>>, vector<128x128xbf16>
    %c0_7 = arith.constant 0 : index
    %c0_8 = arith.constant 0 : index
    %4 = vector.load %arg2[%c0_7, %c0_8] : memref<128x128xf32, #tpu.memory_space<vmem>>, vector<128x128xf32>
    %c0_9 = arith.constant 0 : index
    %c0_10 = arith.constant 0 : index
    %5 = vector.load %arg7[%c0_9, %c0_10] : memref<1x1152xf32, #tpu.memory_space<vmem>>, vector<1x1152xf32>
    %6 = vector.extract_strided_slice %5 {offsets = [0, 0], sizes = [1, 640], strides = [1, 1]} : vector<1x1152xf32> to vector<1x640xf32>
    %7 = vector.extract_strided_slice %5 {offsets = [0, 640], sizes = [1, 384], strides = [1, 1]} : vector<1x1152xf32> to vector<1x384xf32>
    %8 = vector.extract_strided_slice %5 {offsets = [0, 1024], sizes = [1, 128], strides = [1, 1]} : vector<1x1152xf32> to vector<1x128xf32>
    %c0_11 = arith.constant 0 : index
    %c0_12 = arith.constant 0 : index
    %9 = vector.load %arg1[%c0_11, %c0_12] : memref<1x128xf32, #tpu.memory_space<vmem>>, vector<1x128xf32>
    %c0_13 = arith.constant 0 : index
    %c0_14 = arith.constant 0 : index
    %10 = vector.load %arg0[%c0_13, %c0_14] : memref<1x128xbf16, #tpu.memory_space<vmem>>, vector<1x128xbf16>
    %11 = arith.truncf %9 : vector<1x128xf32> to vector<1x128xbf16>
    %12 = tpu.concatenate %10, %11 in 1 : vector<1x128xbf16>, vector<1x128xbf16> -> vector<1x256xbf16>
    %cst = arith.constant dense<0.000000e+00> : vector<1x640xf32>
    %13 = tpu.matmul %12, %0, %cst {dimension_numbers = #tpu.dot_dimension_numbers<[1], [0], [0], [1], [0, 0, 1, 1], [], []>} : vector<1x256xbf16>, vector<256x640xbf16>, vector<1x640xf32> -> vector<1x640xf32>
    %14 = arith.addf %13, %6 : vector<1x640xf32>
    %15 = vector.extract_strided_slice %14 {offsets = [0, 0], sizes = [1, 128], strides = [1, 1]} : vector<1x640xf32> to vector<1x128xf32>
    %cst_15 = arith.constant dense<0xFF800000> : vector<1xf32>
    %16 = vector.multi_reduction <maximumf>, %15, %cst_15 [1] : vector<1x128xf32> to vector<1xf32>
    %17 = vector.shape_cast %16 : vector<1xf32> to vector<1x1xf32>
    %18 = vector.broadcast %17 : vector<1x1xf32> to vector<1x128xf32>
    %19 = arith.subf %15, %18 : vector<1x128xf32>
    %20 = math.exp %19 : vector<1x128xf32>
    %cst_16 = arith.constant dense<0.000000e+00> : vector<1xf32>
    %21 = vector.multi_reduction <add>, %20, %cst_16 [1] : vector<1x128xf32> to vector<1xf32>
    %22 = vector.shape_cast %21 : vector<1xf32> to vector<1x1xf32>
    %23 = tpu.reciprocal %22 {approx = true} : vector<1x1xf32> -> vector<1x1xf32>
    %24 = vector.broadcast %23 : vector<1x1xf32> to vector<1x128xf32>
    %25 = arith.mulf %20, %24 : vector<1x128xf32>
    %cst_17 = arith.constant dense<0.000000e+00> : vector<1x128xf32>
    %26 = tpu.matmul %25, %4, %cst_17 {dimension_numbers = #tpu.dot_dimension_numbers<[1], [0], [0], [1], [0, 0, 1, 1], [], []>} : vector<1x128xf32>, vector<128x128xf32>, vector<1x128xf32> -> vector<1x128xf32>
    %27 = vector.extract_strided_slice %14 {offsets = [0, 128], sizes = [1, 128], strides = [1, 1]} : vector<1x640xf32> to vector<1x128xf32>
    %28 = arith.truncf %26 : vector<1x128xf32> to vector<1x128xbf16>
    %cst_18 = arith.constant dense<0.000000e+00> : vector<1x128xf32>
    %29 = tpu.matmul %28, %1, %cst_18 {dimension_numbers = #tpu.dot_dimension_numbers<[1], [0], [0], [1], [0, 0, 1, 1], [], []>} : vector<1x128xbf16>, vector<128x128xbf16>, vector<1x128xf32> -> vector<1x128xf32>
    %30 = arith.addf %27, %29 : vector<1x128xf32>
    %cst_19 = arith.constant 0.000000e+00 : f32
    %31 = vector.broadcast %cst_19 : f32 to vector<1x128xf32>
    %32 = arith.maximumf %30, %31 : vector<1x128xf32>
    %33 = arith.truncf %32 : vector<1x128xf32> to vector<1x128xbf16>
    %cst_20 = arith.constant dense<0.000000e+00> : vector<1x384xf32>
    %34 = tpu.matmul %33, %2, %cst_20 {dimension_numbers = #tpu.dot_dimension_numbers<[1], [0], [0], [1], [0, 0, 1, 1], [], []>} : vector<1x128xbf16>, vector<128x384xbf16>, vector<1x384xf32> -> vector<1x384xf32>
    %35 = arith.addf %34, %7 : vector<1x384xf32>
    %36 = vector.extract_strided_slice %35 {offsets = [0, 0], sizes = [1, 128], strides = [1, 1]} : vector<1x384xf32> to vector<1x128xf32>
    %37 = vector.extract_strided_slice %14 {offsets = [0, 256], sizes = [1, 128], strides = [1, 1]} : vector<1x640xf32> to vector<1x128xf32>
    %38 = arith.addf %36, %37 : vector<1x128xf32>
    %39 = arith.negf %38 : vector<1x128xf32>
    %40 = math.exp %39 : vector<1x128xf32>
    %cst_21 = arith.constant 1.000000e+00 : f32
    %41 = vector.broadcast %cst_21 : f32 to vector<1x128xf32>
    %42 = arith.addf %41, %40 : vector<1x128xf32>
    %43 = arith.divf %41, %42 : vector<1x128xf32>
    %44 = vector.extract_strided_slice %35 {offsets = [0, 128], sizes = [1, 128], strides = [1, 1]} : vector<1x384xf32> to vector<1x128xf32>
    %45 = vector.extract_strided_slice %14 {offsets = [0, 384], sizes = [1, 128], strides = [1, 1]} : vector<1x640xf32> to vector<1x128xf32>
    %46 = arith.addf %44, %45 : vector<1x128xf32>
    %47 = arith.negf %46 : vector<1x128xf32>
    %48 = math.exp %47 : vector<1x128xf32>
    %cst_22 = arith.constant 1.000000e+00 : f32
    %49 = vector.broadcast %cst_22 : f32 to vector<1x128xf32>
    %50 = arith.addf %49, %48 : vector<1x128xf32>
    %51 = arith.divf %49, %50 : vector<1x128xf32>
    %52 = vector.extract_strided_slice %35 {offsets = [0, 256], sizes = [1, 128], strides = [1, 1]} : vector<1x384xf32> to vector<1x128xf32>
    %53 = vector.extract_strided_slice %14 {offsets = [0, 512], sizes = [1, 128], strides = [1, 1]} : vector<1x640xf32> to vector<1x128xf32>
    %54 = arith.mulf %43, %53 : vector<1x128xf32>
    %55 = arith.addf %52, %54 : vector<1x128xf32>
    %56 = math.tanh %55 : vector<1x128xf32>
    %cst_23 = arith.constant 1.000000e+00 : f32
    %57 = vector.broadcast %cst_23 : f32 to vector<1x128xf32>
    %58 = arith.subf %57, %51 : vector<1x128xf32>
    %59 = arith.mulf %58, %56 : vector<1x128xf32>
    %60 = arith.mulf %51, %9 : vector<1x128xf32>
    %61 = arith.addf %59, %60 : vector<1x128xf32>
    %62 = arith.truncf %61 : vector<1x128xf32> to vector<1x128xbf16>
    %cst_24 = arith.constant dense<0.000000e+00> : vector<1x128xf32>
    %63 = tpu.matmul %62, %3, %cst_24 {dimension_numbers = #tpu.dot_dimension_numbers<[1], [0], [0], [1], [0, 0, 1, 1], [], []>} : vector<1x128xbf16>, vector<128x128xbf16>, vector<1x128xf32> -> vector<1x128xf32>
    %64 = arith.addf %63, %8 : vector<1x128xf32>
    %cst_25 = arith.constant dense<0xFF800000> : vector<1xf32>
    %65 = vector.multi_reduction <maximumf>, %64, %cst_25 [1] : vector<1x128xf32> to vector<1xf32>
    %66 = vector.shape_cast %65 : vector<1xf32> to vector<1x1xf32>
    %67 = vector.broadcast %66 : vector<1x1xf32> to vector<1x128xf32>
    %68 = arith.subf %64, %67 : vector<1x128xf32>
    %69 = math.exp %68 : vector<1x128xf32>
    %cst_26 = arith.constant dense<0.000000e+00> : vector<1xf32>
    %70 = vector.multi_reduction <add>, %69, %cst_26 [1] : vector<1x128xf32> to vector<1xf32>
    %71 = vector.shape_cast %70 : vector<1xf32> to vector<1x1xf32>
    %72 = math.log %71 : vector<1x1xf32>
    %73 = vector.broadcast %72 : vector<1x1xf32> to vector<1x128xf32>
    %74 = arith.subf %68, %73 : vector<1x128xf32>
    %c0_27 = arith.constant 0 : index
    %c0_28 = arith.constant 0 : index
    %75 = vector.load %arg8[%c0_27, %c0_28] : memref<1x384xf32, #tpu.memory_space<vmem>>, vector<1x128xf32>
    tpu.vector_store %arg8[%c0_27, %c0_28], %74 {strides = array<i32>} : memref<1x384xf32, #tpu.memory_space<vmem>>, vector<1x128xf32>,
    %c0_29 = arith.constant 0 : index
    %c128 = arith.constant 128 : index
    %76 = vector.load %arg8[%c0_29, %c128] : memref<1x384xf32, #tpu.memory_space<vmem>>, vector<1x128xf32>
    tpu.vector_store %arg8[%c0_29, %c128], %61 {strides = array<i32>} : memref<1x384xf32, #tpu.memory_space<vmem>>, vector<1x128xf32>,
    %c0_30 = arith.constant 0 : index
    %c256 = arith.constant 256 : index
    %77 = vector.load %arg8[%c0_30, %c256] : memref<1x384xf32, #tpu.memory_space<vmem>>, vector<1x128xf32>
    tpu.vector_store %arg8[%c0_30, %c256], %25 {strides = array<i32>} : memref<1x384xf32, #tpu.memory_space<vmem>>, vector<1x128xf32>,
    return
  }
}

</mosaic_0001>

<llo_original>
// kernel: tpu_custom_call.1
$region0: #{tpu_custom_call.1}
  #allocation0 [shape = 'u32[]', space=smem, size = 0x4, offset = 0x4, fixed_abs, tag = 'smem constant byte address 0x4 - core index']
  #allocation1 [shape = 'u32[144,128]{1,0:T(1,128)}', space=vmem, size = 0x12000, scoped, tag = 'internal scratch']
  %s0 = inlined_call_operand.hbm [shape: bf16[1,128], index: 0, kind: input, shape index: {}]
  %s1 = inlined_call_operand.vmem [shape: f32[1,128], index: 1, kind: input, shape index: {}]
  %s2 = inlined_call_operand.hbm [shape: f32[128,128], index: 2, kind: input, shape index: {}]
  %s3 = inlined_call_operand.hbm [shape: bf16[256,640], index: 3, kind: input, shape index: {}]
  %s4 = inlined_call_operand.hbm [shape: bf16[128,128], index: 4, kind: input, shape index: {}]
  %s5 = inlined_call_operand.hbm [shape: bf16[128,384], index: 5, kind: input, shape index: {}]
  %s6 = inlined_call_operand.hbm [shape: bf16[128,128], index: 6, kind: input, shape index: {}]
  %s7 = inlined_call_operand.vmem [shape: f32[1,1152], index: 7, kind: input, shape index: {}]
  %s8 = inlined_call_operand.hbm [shape: f32[1,384], index: 8, kind: output, shape index: {}]
  %s9 = sld [smem:[#allocation0]]
  $region66: #{tpu_custom_call.1} parent=0
    _
  %s11 = ssub.s32 1, %s9
  %s12 = scalar_select 0, %s11, %s9
  $region1: #{tpu_custom_call.1} parent=0
    #allocation2 [shape = 'u8[512]{0}', space=vmem, size = 0x400, scoped, tag = 'input window, operand 0, single buffered']
    #allocation3 [shape = 's32[1]{0}', space=sflag, size = 0x4, scoped, tag = 'scoped memory for tpu_custom_call.1']
    #allocation4 [shape = 's32[1]{0}', space=sflag, size = 0x4, scoped, tag = 'scoped memory for tpu_custom_call.1']
    #allocation5 [shape = 'u8[65536]{0}', space=vmem, size = 0x10000, scoped, tag = 'input window, operand 2, single buffered']
    #allocation6 [shape = 's32[1]{0}', space=sflag, size = 0x4, scoped, tag = 'scoped memory for tpu_custom_call.1']
    #allocation7 [shape = 'u8[327680]{0}', space=vmem, size = 0x50000, scoped, tag = 'input window, operand 3, single buffered']
    #allocation8 [shape = 'u8[32768]{0}', space=vmem, size = 0x8000, scoped, tag = 'input window, operand 4, single buffered']
    #allocation9 [shape = 's32[1]{0}', space=sflag, size = 0x4, scoped, tag = 'scoped memory for tpu_custom_call.1']
    #allocation10 [shape = 'u8[98304]{0}', space=vmem, size = 0x18000, scoped, tag = 'input window, operand 5, single buffered']
    #allocation11 [shape = 'u8[32768]{0}', space=vmem, size = 0x8000, scoped, tag = 'input window, operand 6, single buffered']
    #allocation12 [shape = 's32[1]{0}', space=sflag, size = 0x4, scoped, tag = 'scoped memory for tpu_custom_call.1']
    #allocation13 [shape = 'u8[1536]{0}', space=vmem, size = 0x800, scoped, tag = 'output window, operand 0, single buffered']
    %13 = vsyncpa [#allocation3], 0
    %14 = vsyncpa [#allocation6], 0
    %15 = vsyncpa [#allocation9], 0
    %16 = vsyncpa [#allocation12], 0
    %17 = vsyncpa [#allocation4], 0
    // Predicated region
    $region2: #{tpu_custom_call.1} parent=1 // pred_check
      _
    $region3: #{tpu_custom_call.1} parent=1 // pred_check_branch
      %19 = sbr.rel (0) target = $region5
    $region4: #{tpu_custom_call.1} parent=1 // pred_region
      %s21 = ssub.s32 16, 16
      %22 = vsyncadd [#allocation3], %s21
      %s24 = sshll.u32 [#allocation2], 4
      %s25 = int_to_ptr.vmem [resolvable:$true] %s24
      %27 = dma.hbm_to_vmem [thread:$0]  %s0, 16, %s25, [#allocation3]
    $region5: #{tpu_custom_call.1} parent=1 // pred_fallthru
      _
    // Predicated region
    $region6: #{tpu_custom_call.1} parent=1 // pred_check
      _
    $region7: #{tpu_custom_call.1} parent=1 // pred_check_branch
      %29 = sbr.rel (0) target = $region9
    $region8: #{tpu_custom_call.1} parent=1 // pred_region
      _
    $region9: #{tpu_custom_call.1} parent=1 // pred_fallthru
      _
    // Predicated region
    $region10: #{tpu_custom_call.1} parent=1 // pred_check
      _
    $region11: #{tpu_custom_call.1} parent=1 // pred_check_branch
      %31 = sbr.rel (0) target = $region13
    $region12: #{tpu_custom_call.1} parent=1 // pred_region
      %s33 = ssub.s32 2048, 2048
      %34 = vsyncadd [#allocation6], %s33
      %s35 = sshll.u32 [#allocation5], 4
      %s36 = int_to_ptr.vmem [resolvable:$true] %s35
      %41 = dma.hbm_to_vmem [thread:$0]  %s2, 2048, %s36, [#allocation6], 128, 128, 8
    $region13: #{tpu_custom_call.1} parent=1 // pred_fallthru
      _
    // Predicated region
    $region14: #{tpu_custom_call.1} parent=1 // pred_check
      _
    $region15: #{tpu_custom_call.1} parent=1 // pred_check_branch
      %43 = sbr.rel (0) target = $region17
    $region16: #{tpu_custom_call.1} parent=1 // pred_region
      %s45 = ssub.s32 10240, 10240
      %46 = vsyncadd [#allocation6], %s45
      %s47 = sshll.u32 [#allocation7], 4
      %s48 = int_to_ptr.vmem [resolvable:$true] %s47
      %53 = dma.hbm_to_vmem [thread:$0]  %s3, 10240, %s48, [#allocation6], 320, 320, 20
    $region17: #{tpu_custom_call.1} parent=1 // pred_fallthru
      _
    // Predicated region
    $region18: #{tpu_custom_call.1} parent=1 // pred_check
      _
    $region19: #{tpu_custom_call.1} parent=1 // pred_check_branch
      %55 = sbr.rel (0) target = $region21
    $region20: #{tpu_custom_call.1} parent=1 // pred_region
      %s57 = ssub.s32 1024, 1024
      %58 = vsyncadd [#allocation9], %s57
      %s59 = sshll.u32 [#allocation8], 4
      %s60 = int_to_ptr.vmem [resolvable:$true] %s59
      %65 = dma.hbm_to_vmem [thread:$0]  %s4, 1024, %s60, [#allocation9], 64, 64, 4
    $region21: #{tpu_custom_call.1} parent=1 // pred_fallthru
      _
    // Predicated region
    $region22: #{tpu_custom_call.1} parent=1 // pred_check
      _
    $region23: #{tpu_custom_call.1} parent=1 // pred_check_branch
      %67 = sbr.rel (0) target = $region25
    $region24: #{tpu_custom_call.1} parent=1 // pred_region
      %s69 = ssub.s32 3072, 3072
      %70 = vsyncadd [#allocation9], %s69
      %s71 = sshll.u32 [#allocation10], 4
      %s72 = int_to_ptr.vmem [resolvable:$true] %s71
      %77 = dma.hbm_to_vmem [thread:$0]  %s5, 3072, %s72, [#allocation9], 192, 192, 12
    $region25: #{tpu_custom_call.1} parent=1 // pred_fallthru
      _
    // Predicated region
    $region26: #{tpu_custom_call.1} parent=1 // pred_check
      _
    $region27: #{tpu_custom_call.1} parent=1 // pred_check_branch
      %79 = sbr.rel (0) target = $region29
    $region28: #{tpu_custom_call.1} parent=1 // pred_region
      %s81 = ssub.s32 1024, 1024
      %82 = vsyncadd [#allocation12], %s81
      %s83 = sshll.u32 [#allocation11], 4
      %s84 = int_to_ptr.vmem [resolvable:$true] %s83
      %89 = dma.hbm_to_vmem [thread:$0]  %s6, 1024, %s84, [#allocation12], 64, 64, 4
    $region29: #{tpu_custom_call.1} parent=1 // pred_fallthru
      _
    // Predicated region
    $region30: #{tpu_custom_call.1} parent=1 // pred_check
      _
    $region31: #{tpu_custom_call.1} parent=1 // pred_check_branch
      %91 = sbr.rel (0) target = $region33
    $region32: #{tpu_custom_call.1} parent=1 // pred_region
      _
    $region33: #{tpu_custom_call.1} parent=1 // pred_fallthru
      _
    // Predicated region
    $region34: #{tpu_custom_call.1} parent=1 // pred_check
      _
    $region35: #{tpu_custom_call.1} parent=1 // pred_check_branch
      %93 = sbr.rel (0) target = $region37
    $region36: #{tpu_custom_call.1} parent=1 // pred_region
      %94 = dma.done [#allocation3], 16
    $region37: #{tpu_custom_call.1} parent=1 // pred_fallthru
      _
    // Predicated region
    $region38: #{tpu_custom_call.1} parent=1 // pred_check
      _
    $region39: #{tpu_custom_call.1} parent=1 // pred_check_branch
      %96 = sbr.rel (0) target = $region41
    $region40: #{tpu_custom_call.1} parent=1 // pred_region
      %97 = dma.done [#allocation6], 2048
    $region41: #{tpu_custom_call.1} parent=1 // pred_fallthru
      _
    // Predicated region
    $region42: #{tpu_custom_call.1} parent=1 // pred_check
      _
    $region43: #{tpu_custom_call.1} parent=1 // pred_check_branch
      %99 = sbr.rel (0) target = $region45
    $region44: #{tpu_custom_call.1} parent=1 // pred_region
      %100 = dma.done [#allocation6], 10240
    $region45: #{tpu_custom_call.1} parent=1 // pred_fallthru
      _
    // Predicated region
    $region46: #{tpu_custom_call.1} parent=1 // pred_check
      _
    $region47: #{tpu_custom_call.1} parent=1 // pred_check_branch
      %102 = sbr.rel (0) target = $region49
    $region48: #{tpu_custom_call.1} parent=1 // pred_region
      %103 = dma.done [#allocation9], 1024
    $region49: #{tpu_custom_call.1} parent=1 // pred_fallthru
      _
    // Predicated region
    $region50: #{tpu_custom_call.1} parent=1 // pred_check
      _
    $region51: #{tpu_custom_call.1} parent=1 // pred_check_branch
      %105 = sbr.rel (0) target = $region53
    $region52: #{tpu_custom_call.1} parent=1 // pred_region
      %106 = dma.done [#allocation9], 3072
    $region53: #{tpu_custom_call.1} parent=1 // pred_fallthru
      _
    // Predicated region
    $region54: #{tpu_custom_call.1} parent=1 // pred_check
      _
    $region55: #{tpu_custom_call.1} parent=1 // pred_check_branch
      %108 = sbr.rel (0) target = $region57
    $region56: #{tpu_custom_call.1} parent=1 // pred_region
      %109 = dma.done [#allocation12], 1024
    $region57: #{tpu_custom_call.1} parent=1 // pred_fallthru
      _
    %v111 = vld [vmem:[#allocation7] sm:$0xff]
    %v112 = vld [vmem:[#allocation7 + $0x8] sm:$0xff]
    %v113 = vld [vmem:[#allocation7 + $0x10] sm:$0xf]
    %v114 = vld [vmem:[#allocation7 + $0x14] sm:$0xff]
    %v115 = vld [vmem:[#allocation7 + $0x1c] sm:$0xff]
    %v116 = vld [vmem:[#allocation7 + $0x24] sm:$0xf]
    %v117 = vld [vmem:[#allocation7 + $0x28] sm:$0xff]
    %v118 = vld [vmem:[#allocation7 + $0x30] sm:$0xff]
    %v119 = vld [vmem:[#allocation7 + $0x38] sm:$0xf]
    %v120 = vld [vmem:[#allocation7 + $0x3c] sm:$0xff]
    %v121 = vld [vmem:[#allocation7 + $0x44] sm:$0xff]
    %v122 = vld [vmem:[#allocation7 + $0x4c] sm:$0xf]
    %v123 = vld [vmem:[#allocation7 + $0x50] sm:$0xff]
    %v124 = vld [vmem:[#allocation7 + $0x58] sm:$0xff]
    %v125 = vld [vmem:[#allocation7 + $0x60] sm:$0xf]
    %v126 = vld [vmem:[#allocation7 + $0x64] sm:$0xff]
    %v127 = vld [vmem:[#allocation7 + $0x6c] sm:$0xff]
    %v128 = vld [vmem:[#allocation7 + $0x74] sm:$0xf]
    %v129 = vld [vmem:[#allocation7 + $0x78] sm:$0xff]
    %v130 = vld [vmem:[#allocation7 + $0x80] sm:$0xff]
    %v131 = vld [vmem:[#allocation7 + $0x88] sm:$0xf]
    %v132 = vld [vmem:[#allocation7 + $0x8c] sm:$0xff]
    %v133 = vld [vmem:[#allocation7 + $0x94] sm:$0xff]
    %v134 = vld [vmem:[#allocation7 + $0x9c] sm:$0xf]
    %v135 = vld [vmem:[#allocation7 + $0xa0] sm:$0xff]
    %v136 = vld [vmem:[#allocation7 + $0xa8] sm:$0xff]
    %v137 = vld [vmem:[#allocation7 + $0xb0] sm:$0xf]
    %v138 = vld [vmem:[#allocation7 + $0xb4] sm:$0xff]
    %v139 = vld [vmem:[#allocation7 + $0xbc] sm:$0xff]
    %v140 = vld [vmem:[#allocation7 + $0xc4] sm:$0xf]
    %v141 = vld [vmem:[#allocation7 + $0xc8] sm:$0xff]
    %v142 = vld [vmem:[#allocation7 + $0xd0] sm:$0xff]
    %v143 = vld [vmem:[#allocation7 + $0xd8] sm:$0xf]
    %v144 = vld [vmem:[#allocation7 + $0xdc] sm:$0xff]
    %v145 = vld [vmem:[#allocation7 + $0xe4] sm:$0xff]
    %v146 = vld [vmem:[#allocation7 + $0xec] sm:$0xf]
    %v147 = vld [vmem:[#allocation7 + $0xf0] sm:$0xff]
    %v148 = vld [vmem:[#allocation7 + $0xf8] sm:$0xff]
    %v149 = vld [vmem:[#allocation7 + $0x100] sm:$0xf]
    %v150 = vld [vmem:[#allocation7 + $0x104] sm:$0xff]
    %v151 = vld [vmem:[#allocation7 + $0x10c] sm:$0xff]
    %v152 = vld [vmem:[#allocation7 + $0x114] sm:$0xf]
    %v153 = vld [vmem:[#allocation7 + $0x118] sm:$0xff]
    %v154 = vld [vmem:[#allocation7 + $0x120] sm:$0xff]
    %v155 = vld [vmem:[#allocation7 + $0x128] sm:$0xf]
    %v156 = vld [vmem:[#allocation7 + $0x12c] sm:$0xff]
    %v157 = vld [vmem:[#allocation7 + $0x134] sm:$0xff]
    %v158 = vld [vmem:[#allocation7 + $0x13c] sm:$0xf]
    %v159 = vld [vmem:[#allocation7 + $0x140] sm:$0xff]
    %v160 = vld [vmem:[#allocation7 + $0x148] sm:$0xff]
    %v161 = vld [vmem:[#allocation7 + $0x150] sm:$0xf]
    %v162 = vld [vmem:[#allocation7 + $0x154] sm:$0xff]
    %v163 = vld [vmem:[#allocation7 + $0x15c] sm:$0xff]
    %v164 = vld [vmem:[#allocation7 + $0x164] sm:$0xf]
    %v165 = vld [vmem:[#allocation7 + $0x168] sm:$0xff]
    %v166 = vld [vmem:[#allocation7 + $0x170] sm:$0xff]
    %v167 = vld [vmem:[#allocation7 + $0x178] sm:$0xf]
    %v168 = vld [vmem:[#allocation7 + $0x17c] sm:$0xff]
    %v169 = vld [vmem:[#allocation7 + $0x184] sm:$0xff]
    %v170 = vld [vmem:[#allocation7 + $0x18c] sm:$0xf]
    %v171 = vld [vmem:[#allocation7 + $0x190] sm:$0xff]
    %v172 = vld [vmem:[#allocation7 + $0x198] sm:$0xff]
    %v173 = vld [vmem:[#allocation7 + $0x1a0] sm:$0xf]
    %v174 = vld [vmem:[#allocation7 + $0x1a4] sm:$0xff]
    %v175 = vld [vmem:[#allocation7 + $0x1ac] sm:$0xff]
    %v176 = vld [vmem:[#allocation7 + $0x1b4] sm:$0xf]
    %v177 = vld [vmem:[#allocation7 + $0x1b8] sm:$0xff]
    %v178 = vld [vmem:[#allocation7 + $0x1c0] sm:$0xff]
    %v179 = vld [vmem:[#allocation7 + $0x1c8] sm:$0xf]
    %v180 = vld [vmem:[#allocation7 + $0x1cc] sm:$0xff]
    %v181 = vld [vmem:[#allocation7 + $0x1d4] sm:$0xff]
    %v182 = vld [vmem:[#allocation7 + $0x1dc] sm:$0xf]
    %v183 = vld [vmem:[#allocation7 + $0x1e0] sm:$0xff]
    %v184 = vld [vmem:[#allocation7 + $0x1e8] sm:$0xff]
    %v185 = vld [vmem:[#allocation7 + $0x1f0] sm:$0xf]
    %v186 = vld [vmem:[#allocation7 + $0x1f4] sm:$0xff]
    %v187 = vld [vmem:[#allocation7 + $0x1fc] sm:$0xff]
    %v188 = vld [vmem:[#allocation7 + $0x204] sm:$0xf]
    %v189 = vld [vmem:[#allocation7 + $0x208] sm:$0xff]
    %v190 = vld [vmem:[#allocation7 + $0x210] sm:$0xff]
    %v191 = vld [vmem:[#allocation7 + $0x218] sm:$0xf]
    %v192 = vld [vmem:[#allocation7 + $0x21c] sm:$0xff]
    %v193 = vld [vmem:[#allocation7 + $0x224] sm:$0xff]
    %v194 = vld [vmem:[#allocation7 + $0x22c] sm:$0xf]
    %v195 = vld [vmem:[#allocation7 + $0x230] sm:$0xff]
    %v196 = vld [vmem:[#allocation7 + $0x238] sm:$0xff]
    %v197 = vld [vmem:[#allocation7 + $0x240] sm:$0xf]
    %v198 = vld [vmem:[#allocation7 + $0x244] sm:$0xff]
    %v199 = vld [vmem:[#allocation7 + $0x24c] sm:$0xff]
    %v200 = vld [vmem:[#allocation7 + $0x254] sm:$0xf]
    %v201 = vld [vmem:[#allocation7 + $0x258] sm:$0xff]
    %v202 = vld [vmem:[#allocation7 + $0x260] sm:$0xff]
    %v203 = vld [vmem:[#allocation7 + $0x268] sm:$0xf]
    %v204 = vld [vmem:[#allocation7 + $0x26c] sm:$0xff]
    %v205 = vld [vmem:[#allocation7 + $0x274] sm:$0xff]
    %v206 = vld [vmem:[#allocation7 + $0x27c] sm:$0xf]
    %v207 = vld [vmem:[#allocation8] sm:$0xf]
    %v208 = vld [vmem:[#allocation8 + $0x4] sm:$0xf]
    %v209 = vld [vmem:[#allocation8 + $0x8] sm:$0xf]
    %v210 = vld [vmem:[#allocation8 + $0xc] sm:$0xf]
    %v211 = vld [vmem:[#allocation8 + $0x10] sm:$0xf]
    %v212 = vld [vmem:[#allocation8 + $0x14] sm:$0xf]
    %v213 = vld [vmem:[#allocation8 + $0x18] sm:$0xf]
    %v214 = vld [vmem:[#allocation8 + $0x1c] sm:$0xf]
    %v215 = vld [vmem:[#allocation8 + $0x20] sm:$0xf]
    %v216 = vld [vmem:[#allocation8 + $0x24] sm:$0xf]
    %v217 = vld [vmem:[#allocation8 + $0x28] sm:$0xf]
    %v218 = vld [vmem:[#allocation8 + $0x2c] sm:$0xf]
    %v219 = vld [vmem:[#allocation8 + $0x30] sm:$0xf]
    %v220 = vld [vmem:[#allocation8 + $0x34] sm:$0xf]
    %v221 = vld [vmem:[#allocation8 + $0x38] sm:$0xf]
    %v222 = vld [vmem:[#allocation8 + $0x3c] sm:$0xf]
    %v223 = vld [vmem:[#allocation10] sm:$0xff]
    %v224 = vld [vmem:[#allocation10 + $0x8] sm:$0xf]
    %v225 = vld [vmem:[#allocation10 + $0xc] sm:$0xff]
    %v226 = vld [vmem:[#allocation10 + $0x14] sm:$0xf]
    %v227 = vld [vmem:[#allocation10 + $0x18] sm:$0xff]
    %v228 = vld [vmem:[#allocation10 + $0x20] sm:$0xf]
    %v229 = vld [vmem:[#allocation10 + $0x24] sm:$0xff]
    %v230 = vld [vmem:[#allocation10 + $0x2c] sm:$0xf]
    %v231 = vld [vmem:[#allocation10 + $0x30] sm:$0xff]
    %v232 = vld [vmem:[#allocation10 + $0x38] sm:$0xf]
    %v233 = vld [vmem:[#allocation10 + $0x3c] sm:$0xff]
    %v234 = vld [vmem:[#allocation10 + $0x44] sm:$0xf]
    %v235 = vld [vmem:[#allocation10 + $0x48] sm:$0xff]
    %v236 = vld [vmem:[#allocation10 + $0x50] sm:$0xf]
    %v237 = vld [vmem:[#allocation10 + $0x54] sm:$0xff]
    %v238 = vld [vmem:[#allocation10 + $0x5c] sm:$0xf]
    %v239 = vld [vmem:[#allocation10 + $0x60] sm:$0xff]
    %v240 = vld [vmem:[#allocation10 + $0x68] sm:$0xf]
    %v241 = vld [vmem:[#allocation10 + $0x6c] sm:$0xff]
    %v242 = vld [vmem:[#allocation10 + $0x74] sm:$0xf]
    %v243 = vld [vmem:[#allocation10 + $0x78] sm:$0xff]
    %v244 = vld [vmem:[#allocation10 + $0x80] sm:$0xf]
    %v245 = vld [vmem:[#allocation10 + $0x84] sm:$0xff]
    %v246 = vld [vmem:[#allocation10 + $0x8c] sm:$0xf]
    %v247 = vld [vmem:[#allocation10 + $0x90] sm:$0xff]
    %v248 = vld [vmem:[#allocation10 + $0x98] sm:$0xf]
    %v249 = vld [vmem:[#allocation10 + $0x9c] sm:$0xff]
    %v250 = vld [vmem:[#allocation10 + $0xa4] sm:$0xf]
    %v251 = vld [vmem:[#allocation10 + $0xa8] sm:$0xff]
    %v252 = vld [vmem:[#allocation10 + $0xb0] sm:$0xf]
    %v253 = vld [vmem:[#allocation10 + $0xb4] sm:$0xff]
    %v254 = vld [vmem:[#allocation10 + $0xbc] sm:$0xf]
    %v255 = vld [vmem:[#allocation11] sm:$0xf]
    %v256 = vld [vmem:[#allocation11 + $0x4] sm:$0xf]
    %v257 = vld [vmem:[#allocation11 + $0x8] sm:$0xf]
    %v258 = vld [vmem:[#allocation11 + $0xc] sm:$0xf]
    %v259 = vld [vmem:[#allocation11 + $0x10] sm:$0xf]
    %v260 = vld [vmem:[#allocation11 + $0x14] sm:$0xf]
    %v261 = vld [vmem:[#allocation11 + $0x18] sm:$0xf]
    %v262 = vld [vmem:[#allocation11 + $0x1c] sm:$0xf]
    %v263 = vld [vmem:[#allocation11 + $0x20] sm:$0xf]
    %v264 = vld [vmem:[#allocation11 + $0x24] sm:$0xf]
    %v265 = vld [vmem:[#allocation11 + $0x28] sm:$0xf]
    %v266 = vld [vmem:[#allocation11 + $0x2c] sm:$0xf]
    %v267 = vld [vmem:[#allocation11 + $0x30] sm:$0xf]
    %v268 = vld [vmem:[#allocation11 + $0x34] sm:$0xf]
    %v269 = vld [vmem:[#allocation11 + $0x38] sm:$0xf]
    %v270 = vld [vmem:[#allocation11 + $0x3c] sm:$0xf]
    %v271 = vld [vmem:[#allocation5] sm:$0xff]
    %v272 = vld [vmem:[#allocation5 + $0x8] sm:$0xff]
    %v273 = vld [vmem:[#allocation5 + $0x10] sm:$0xff]
    %v274 = vld [vmem:[#allocation5 + $0x18] sm:$0xff]
    %v275 = vld [vmem:[#allocation5 + $0x20] sm:$0xff]
    %v276 = vld [vmem:[#allocation5 + $0x28] sm:$0xff]
    %v277 = vld [vmem:[#allocation5 + $0x30] sm:$0xff]
    %v278 = vld [vmem:[#allocation5 + $0x38] sm:$0xff]
    %v279 = vld [vmem:[#allocation5 + $0x40] sm:$0xff]
    %v280 = vld [vmem:[#allocation5 + $0x48] sm:$0xff]
    %v281 = vld [vmem:[#allocation5 + $0x50] sm:$0xff]
    %v282 = vld [vmem:[#allocation5 + $0x58] sm:$0xff]
    %v283 = vld [vmem:[#allocation5 + $0x60] sm:$0xff]
    %v284 = vld [vmem:[#allocation5 + $0x68] sm:$0xff]
    %v285 = vld [vmem:[#allocation5 + $0x70] sm:$0xff]
    %v286 = vld [vmem:[#allocation5 + $0x78] sm:$0xff]
    %v287 = vld [vmem:[%s7] sm:$0xff]
    %v288 = vld [vmem:[%s7 + $0x8] sm:$0x1]
    %v289 = vld [vmem:[%s1] sm:$0x1]
    %v290 = vld [vmem:[#allocation2] sm:$0x1]
    %v291 = vpack.c.bf16 %v289, %v289
    %v388 = vunpack.c.l.b16 %v111
    %v389 = vunpack.c.h.b16 %v111
    %v390 = vunpack.c.l.b16 %v112
    %v391 = vunpack.c.h.b16 %v112
    %v392 = vunpack.c.l.b16 %v113
    %v393 = vunpack.c.l.b16 %v114
    %v394 = vunpack.c.h.b16 %v114
    %v395 = vunpack.c.l.b16 %v115
    %v396 = vunpack.c.h.b16 %v115
    %v397 = vunpack.c.l.b16 %v116
    %v398 = vunpack.c.l.b16 %v117
    %v399 = vunpack.c.h.b16 %v117
    %v400 = vunpack.c.l.b16 %v118
    %v401 = vunpack.c.h.b16 %v118
    %v402 = vunpack.c.l.b16 %v119
    %v403 = vunpack.c.l.b16 %v120
    %v404 = vunpack.c.h.b16 %v120
    %v405 = vunpack.c.l.b16 %v121
    %v406 = vunpack.c.h.b16 %v121
    %v407 = vunpack.c.l.b16 %v122
    %v408 = vunpack.c.l.b16 %v123
    %v409 = vunpack.c.h.b16 %v123
    %v410 = vunpack.c.l.b16 %v124
    %v411 = vunpack.c.h.b16 %v124
    %v412 = vunpack.c.l.b16 %v125
    %v413 = vunpack.c.l.b16 %v126
    %v414 = vunpack.c.h.b16 %v126
    %v415 = vunpack.c.l.b16 %v127
    %v416 = vunpack.c.h.b16 %v127
    %v417 = vunpack.c.l.b16 %v128
    %v418 = vunpack.c.l.b16 %v129
    %v419 = vunpack.c.h.b16 %v129
    %v420 = vunpack.c.l.b16 %v130
    %v421 = vunpack.c.h.b16 %v130
    %v422 = vunpack.c.l.b16 %v131
    %v423 = vunpack.c.l.b16 %v132
    %v424 = vunpack.c.h.b16 %v132
    %v425 = vunpack.c.l.b16 %v133
    %v426 = vunpack.c.h.b16 %v133
    %v427 = vunpack.c.l.b16 %v134
    %v428 = vunpack.c.l.b16 %v135
    %v429 = vunpack.c.h.b16 %v135
    %v430 = vunpack.c.l.b16 %v136
    %v431 = vunpack.c.h.b16 %v136
    %v432 = vunpack.c.l.b16 %v137
    %v433 = vunpack.c.l.b16 %v138
    %v434 = vunpack.c.h.b16 %v138
    %v435 = vunpack.c.l.b16 %v139
    %v436 = vunpack.c.h.b16 %v139
    %v437 = vunpack.c.l.b16 %v140
    %v438 = vunpack.c.l.b16 %v141
    %v439 = vunpack.c.h.b16 %v141
    %v440 = vunpack.c.l.b16 %v142
    %v441 = vunpack.c.h.b16 %v142
    %v442 = vunpack.c.l.b16 %v143
    %v443 = vunpack.c.l.b16 %v144
    %v444 = vunpack.c.h.b16 %v144
    %v445 = vunpack.c.l.b16 %v145
    %v446 = vunpack.c.h.b16 %v145
    %v447 = vunpack.c.l.b16 %v146
    %v448 = vunpack.c.l.b16 %v147
    %v449 = vunpack.c.h.b16 %v147
    %v450 = vunpack.c.l.b16 %v148
    %v451 = vunpack.c.h.b16 %v148
    %v452 = vunpack.c.l.b16 %v149
    %v453 = vunpack.c.l.b16 %v150
    %v454 = vunpack.c.h.b16 %v150
    %v455 = vunpack.c.l.b16 %v151
    %v456 = vunpack.c.h.b16 %v151
    %v457 = vunpack.c.l.b16 %v152
    %v458 = vunpack.c.l.b16 %v153
    %v459 = vunpack.c.h.b16 %v153
    %v460 = vunpack.c.l.b16 %v154
    %v461 = vunpack.c.h.b16 %v154
    %v462 = vunpack.c.l.b16 %v155
    %v463 = vunpack.c.l.b16 %v156
    %v464 = vunpack.c.h.b16 %v156
    %v465 = vunpack.c.l.b16 %v157
    %v466 = vunpack.c.h.b16 %v157
    %v467 = vunpack.c.l.b16 %v158
    %v468 = vunpack.c.l.b16 %v159
    %v469 = vunpack.c.h.b16 %v159
    %v470 = vunpack.c.l.b16 %v160
    %v471 = vunpack.c.h.b16 %v160
    %v472 = vunpack.c.l.b16 %v161
    %v473 = vunpack.c.l.b16 %v162
    %v474 = vunpack.c.h.b16 %v162
    %v475 = vunpack.c.l.b16 %v163
    %v476 = vunpack.c.h.b16 %v163
    %v477 = vunpack.c.l.b16 %v164
    %v478 = vunpack.c.l.b16 %v165
    %v479 = vunpack.c.h.b16 %v165
    %v480 = vunpack.c.l.b16 %v166
    %v481 = vunpack.c.h.b16 %v166
    %v482 = vunpack.c.l.b16 %v167
    %v483 = vunpack.c.l.b16 %v168
    %v484 = vunpack.c.h.b16 %v168
    %v485 = vunpack.c.l.b16 %v169
    %v486 = vunpack.c.h.b16 %v169
    %v487 = vunpack.c.l.b16 %v170
    %v488 = vunpack.c.l.b16 %v171
    %v489 = vunpack.c.h.b16 %v171
    %v490 = vunpack.c.l.b16 %v172
    %v491 = vunpack.c.h.b16 %v172
    %v492 = vunpack.c.l.b16 %v173
    %v493 = vunpack.c.l.b16 %v174
    %v494 = vunpack.c.h.b16 %v174
    %v495 = vunpack.c.l.b16 %v175
    %v496 = vunpack.c.h.b16 %v175
    %v497 = vunpack.c.l.b16 %v176
    %v498 = vunpack.c.l.b16 %v177
    %v499 = vunpack.c.h.b16 %v177
    %v500 = vunpack.c.l.b16 %v178
    %v501 = vunpack.c.h.b16 %v178
    %v502 = vunpack.c.l.b16 %v179
    %v503 = vunpack.c.l.b16 %v180
    %v504 = vunpack.c.h.b16 %v180
    %v505 = vunpack.c.l.b16 %v181
    %v506 = vunpack.c.h.b16 %v181
    %v507 = vunpack.c.l.b16 %v182
    %v508 = vunpack.c.l.b16 %v183
    %v509 = vunpack.c.h.b16 %v183
    %v510 = vunpack.c.l.b16 %v184
    %v511 = vunpack.c.h.b16 %v184
    %v512 = vunpack.c.l.b16 %v185
    %v513 = vunpack.c.l.b16 %v186
    %v514 = vunpack.c.h.b16 %v186
    %v515 = vunpack.c.l.b16 %v187
    %v516 = vunpack.c.h.b16 %v187
    %v517 = vunpack.c.l.b16 %v188
    %v518 = vunpack.c.l.b16 %v189
    %v519 = vunpack.c.h.b16 %v189
    %v520 = vunpack.c.l.b16 %v190
    %v521 = vunpack.c.h.b16 %v190
    %v522 = vunpack.c.l.b16 %v191
    %v523 = vunpack.c.l.b16 %v192
    %v524 = vunpack.c.h.b16 %v192
    %v525 = vunpack.c.l.b16 %v193
    %v526 = vunpack.c.h.b16 %v193
    %v527 = vunpack.c.l.b16 %v194
    %v528 = vunpack.c.l.b16 %v195
    %v529 = vunpack.c.h.b16 %v195
    %v530 = vunpack.c.l.b16 %v196
    %v531 = vunpack.c.h.b16 %v196
    %v532 = vunpack.c.l.b16 %v197
    %v533 = vunpack.c.l.b16 %v198
    %v534 = vunpack.c.h.b16 %v198
    %v535 = vunpack.c.l.b16 %v199
    %v536 = vunpack.c.h.b16 %v199
    %v537 = vunpack.c.l.b16 %v200
    %v538 = vunpack.c.l.b16 %v201
    %v539 = vunpack.c.h.b16 %v201
    %v540 = vunpack.c.l.b16 %v202
    %v541 = vunpack.c.h.b16 %v202
    %v542 = vunpack.c.l.b16 %v203
    %v543 = vunpack.c.l.b16 %v204
    %v544 = vunpack.c.h.b16 %v204
    %v545 = vunpack.c.l.b16 %v205
    %v546 = vunpack.c.h.b16 %v205
    %v547 = vunpack.c.l.b16 %v206
    %v548 = vpack.c.b16 %v393, %v388
    %v549 = vpack.c.b16 %v394, %v389
    %v550 = vpack.c.b16 %v395, %v390
    %v551 = vpack.c.b16 %v396, %v391
    %v552 = vpack.c.b16 %v397, %v392
    %v553 = vpack.c.b16 %v403, %v398
    %v554 = vpack.c.b16 %v404, %v399
    %v555 = vpack.c.b16 %v405, %v400
    %v556 = vpack.c.b16 %v406, %v401
    %v557 = vpack.c.b16 %v407, %v402
    %v558 = vpack.c.b16 %v413, %v408
    %v559 = vpack.c.b16 %v414, %v409
    %v560 = vpack.c.b16 %v415, %v410
    %v561 = vpack.c.b16 %v416, %v411
    %v562 = vpack.c.b16 %v417, %v412
    %v563 = vpack.c.b16 %v423, %v418
    %v564 = vpack.c.b16 %v424, %v419
    %v565 = vpack.c.b16 %v425, %v420
    %v566 = vpack.c.b16 %v426, %v421
    %v567 = vpack.c.b16 %v427, %v422
    %v568 = vpack.c.b16 %v433, %v428
    %v569 = vpack.c.b16 %v434, %v429
    %v570 = vpack.c.b16 %v435, %v430
    %v571 = vpack.c.b16 %v436, %v431
    %v572 = vpack.c.b16 %v437, %v432
    %v573 = vpack.c.b16 %v443, %v438
    %v574 = vpack.c.b16 %v444, %v439
    %v575 = vpack.c.b16 %v445, %v440
    %v576 = vpack.c.b16 %v446, %v441
    %v577 = vpack.c.b16 %v447, %v442
    %v578 = vpack.c.b16 %v453, %v448
    %v579 = vpack.c.b16 %v454, %v449
    %v580 = vpack.c.b16 %v455, %v450
    %v581 = vpack.c.b16 %v456, %v451
    %v582 = vpack.c.b16 %v457, %v452
    %v583 = vpack.c.b16 %v463, %v458
    %v584 = vpack.c.b16 %v464, %v459
    %v585 = vpack.c.b16 %v465, %v460
    %v586 = vpack.c.b16 %v466, %v461
    %v587 = vpack.c.b16 %v467, %v462
    %v588 = vpack.c.b16 %v473, %v468
    %v589 = vpack.c.b16 %v474, %v469
    %v590 = vpack.c.b16 %v475, %v470
    %v591 = vpack.c.b16 %v476, %v471
    %v592 = vpack.c.b16 %v477, %v472
    %v593 = vpack.c.b16 %v483, %v478
    %v594 = vpack.c.b16 %v484, %v479
    %v595 = vpack.c.b16 %v485, %v480
    %v596 = vpack.c.b16 %v486, %v481
    %v597 = vpack.c.b16 %v487, %v482
    %v598 = vpack.c.b16 %v493, %v488
    %v599 = vpack.c.b16 %v494, %v489
    %v600 = vpack.c.b16 %v495, %v490
    %v601 = vpack.c.b16 %v496, %v491
    %v602 = vpack.c.b16 %v497, %v492
    %v603 = vpack.c.b16 %v503, %v498
    %v604 = vpack.c.b16 %v504, %v499
    %v605 = vpack.c.b16 %v505, %v500
    %v606 = vpack.c.b16 %v506, %v501
    %v607 = vpack.c.b16 %v507, %v502
    %v608 = vpack.c.b16 %v513, %v508
    %v609 = vpack.c.b16 %v514, %v509
    %v610 = vpack.c.b16 %v515, %v510
    %v611 = vpack.c.b16 %v516, %v511
    %v612 = vpack.c.b16 %v517, %v512
    %v613 = vpack.c.b16 %v523, %v518
    %v614 = vpack.c.b16 %v524, %v519
    %v615 = vpack.c.b16 %v525, %v520
    %v616 = vpack.c.b16 %v526, %v521
    %v617 = vpack.c.b16 %v527, %v522
    %v618 = vpack.c.b16 %v533, %v528
    %v619 = vpack.c.b16 %v534, %v529
    %v620 = vpack.c.b16 %v535, %v530
    %v621 = vpack.c.b16 %v536, %v531
    %v622 = vpack.c.b16 %v537, %v532
    %v623 = vpack.c.b16 %v543, %v538
    %v624 = vpack.c.b16 %v544, %v539
    %v625 = vpack.c.b16 %v545, %v540
    %v626 = vpack.c.b16 %v546, %v541
    %v627 = vpack.c.b16 %v547, %v542
    %v709 = vlaneseq
    %v710 = vshrl.u32 %v709, 7
    %v711 = vsub.s32 0, %v710
    %v712 = vrot.slane %v287, %v711
    %v713 = vlaneseq
    %v714 = vshrl.u32 %v713, 7
    %v715 = vsub.s32 1, %v714
    %v716 = vrot.slane %v287, %v715
    %v717 = vlaneseq
    %v718 = vshrl.u32 %v717, 7
    %v719 = vsub.s32 2, %v718
    %v720 = vrot.slane %v287, %v719
    %v721 = vlaneseq
    %v722 = vshrl.u32 %v721, 7
    %v723 = vsub.s32 3, %v722
    %v724 = vrot.slane %v287, %v723
    %v725 = vlaneseq
    %v726 = vshrl.u32 %v725, 7
    %v727 = vsub.s32 4, %v726
    %v728 = vrot.slane %v287, %v727
    %734 = vmatprep.subr.bf16.mxu0 %v549
    %735 = vmatpush1.bf16.msra.mxu0 %v548
    %736 = vmatprep.subr.bf16.mxu0 %v554
    %737 = vmatpush1.bf16.msra.mxu0 %v553
    %738 = vmatprep.subr.bf16.mxu0 %v559
    %739 = vmatpush1.bf16.msra.mxu0 %v558
    %740 = vmatprep.subr.bf16.mxu0 %v564
    %741 = vmatpush1.bf16.msra.mxu0 %v563
    %742 = vmatprep.subr.bf16.mxu0 %v569
    %743 = vmatpush1.bf16.msra.mxu0 %v568
    %744 = vmatprep.subr.bf16.mxu0 %v574
    %745 = vmatpush1.bf16.msra.mxu0 %v573
    %746 = vmatprep.subr.bf16.mxu0 %v579
    %747 = vmatpush1.bf16.msra.mxu0 %v578
    %748 = vmatprep.subr.bf16.mxu0 %v584
    %749 = vmatpush1.bf16.msra.mxu0 %v583
    %750 = vmatprep.subr.bf16.mxu0 %v589
    %751 = vmatpush1.bf16.msra.mxu0 %v588
    %752 = vmatprep.subr.bf16.mxu0 %v594
    %753 = vmatpush1.bf16.msra.mxu0 %v593
    %754 = vmatprep.subr.bf16.mxu0 %v599
    %755 = vmatpush1.bf16.msra.mxu0 %v598
    %756 = vmatprep.subr.bf16.mxu0 %v604
    %757 = vmatpush1.bf16.msra.mxu0 %v603
    %758 = vmatprep.subr.bf16.mxu0 %v609
    %759 = vmatpush1.bf16.msra.mxu0 %v608
    %760 = vmatprep.subr.bf16.mxu0 %v614
    %761 = vmatpush1.bf16.msra.mxu0 %v613
    %762 = vmatprep.subr.bf16.mxu0 %v619
    %763 = vmatpush1.bf16.msra.mxu0 %v618
    %764 = vmatprep.subr.bf16.mxu0 %v624
    %765 = vmatpush1.bf16.msra.mxu0 %v623
    %766 = vmatprep.mubr.bf16.mxu0 %v291
    %767 = vmatmul.mubr.bf16.gmra.mrb[0].mxu0 %v290
    %v768 = vpop.f32.mrb[0].mxu0
    %v769 = vadd.f32 %v712, %v768
    %v770 = vpop.f32.mrb[0].mxu0
    %v771 = vadd.f32 %v716, %v770
    %v772 = vpop.f32.mrb[0].mxu0
    %v773 = vpop.f32.mrb[0].mxu0
    %774 = vdwg.mxu0
    %775 = vmatprep.subr.bf16.mxu0 %v551
    %776 = vmatpush1.bf16.msra.mxu0 %v550
    %777 = vmatprep.subr.bf16.mxu0 %v556
    %778 = vmatpush1.bf16.msra.mxu0 %v555
    %779 = vmatprep.subr.bf16.mxu0 %v561
    %780 = vmatpush1.bf16.msra.mxu0 %v560
    %781 = vmatprep.subr.bf16.mxu0 %v566
    %782 = vmatpush1.bf16.msra.mxu0 %v565
    %783 = vmatprep.subr.bf16.mxu0 %v571
    %784 = vmatpush1.bf16.msra.mxu0 %v570
    %785 = vmatprep.subr.bf16.mxu0 %v576
    %786 = vmatpush1.bf16.msra.mxu0 %v575
    %787 = vmatprep.subr.bf16.mxu0 %v581
    %788 = vmatpush1.bf16.msra.mxu0 %v580
    %789 = vmatprep.subr.bf16.mxu0 %v586
    %790 = vmatpush1.bf16.msra.mxu0 %v585
    %791 = vmatprep.subr.bf16.mxu0 %v591
    %792 = vmatpush1.bf16.msra.mxu0 %v590
    %793 = vmatprep.subr.bf16.mxu0 %v596
    %794 = vmatpush1.bf16.msra.mxu0 %v595
    %795 = vmatprep.subr.bf16.mxu0 %v601
    %796 = vmatpush1.bf16.msra.mxu0 %v600
    %797 = vmatprep.subr.bf16.mxu0 %v606
    %798 = vmatpush1.bf16.msra.mxu0 %v605
    %799 = vmatprep.subr.bf16.mxu0 %v611
    %800 = vmatpush1.bf16.msra.mxu0 %v610
    %801 = vmatprep.subr.bf16.mxu0 %v616
    %802 = vmatpush1.bf16.msra.mxu0 %v615
    %803 = vmatprep.subr.bf16.mxu0 %v621
    %804 = vmatpush1.bf16.msra.mxu0 %v620
    %805 = vmatprep.subr.bf16.mxu0 %v626
    %806 = vmatpush1.bf16.msra.mxu0 %v625
    %807 = vmatprep.mubr.bf16.mxu0 %v291
    %808 = vmatmul.mubr.bf16.gmra.mrb[0].mxu0 %v290
    %v809 = vpop.f32.mrb[0].mxu0
    %v810 = vadd.f32 %v720, %v809
    %v811 = vpop.f32.mrb[0].mxu0
    %v812 = vadd.f32 %v724, %v811
    %v813 = vpop.f32.mrb[0].mxu0
    %v814 = vpop.f32.mrb[0].mxu0
    %815 = vdwg.mxu0
    %816 = vmatprep.subr.bf16.mxu0 0
    %817 = vmatpush1.bf16.msra.mxu0 %v552
    %818 = vmatprep.subr.bf16.mxu0 0
    %819 = vmatpush1.bf16.msra.mxu0 %v557
    %820 = vmatprep.subr.bf16.mxu0 0
    %821 = vmatpush1.bf16.msra.mxu0 %v562
    %822 = vmatprep.subr.bf16.mxu0 0
    %823 = vmatpush1.bf16.msra.mxu0 %v567
    %824 = vmatprep.subr.bf16.mxu0 0
    %825 = vmatpush1.bf16.msra.mxu0 %v572
    %826 = vmatprep.subr.bf16.mxu0 0
    %827 = vmatpush1.bf16.msra.mxu0 %v577
    %828 = vmatprep.subr.bf16.mxu0 0
    %829 = vmatpush1.bf16.msra.mxu0 %v582
    %830 = vmatprep.subr.bf16.mxu0 0
    %831 = vmatpush1.bf16.msra.mxu0 %v587
    %832 = vmatprep.subr.bf16.mxu0 0
    %833 = vmatpush1.bf16.msra.mxu0 %v592
    %834 = vmatprep.subr.bf16.mxu0 0
    %835 = vmatpush1.bf16.msra.mxu0 %v597
    %836 = vmatprep.subr.bf16.mxu0 0
    %837 = vmatpush1.bf16.msra.mxu0 %v602
    %838 = vmatprep.subr.bf16.mxu0 0
    %839 = vmatpush1.bf16.msra.mxu0 %v607
    %840 = vmatprep.subr.bf16.mxu0 0
    %841 = vmatpush1.bf16.msra.mxu0 %v612
    %842 = vmatprep.subr.bf16.mxu0 0
    %843 = vmatpush1.bf16.msra.mxu0 %v617
    %844 = vmatprep.subr.bf16.mxu0 0
    %845 = vmatpush1.bf16.msra.mxu0 %v622
    %846 = vmatprep.subr.bf16.mxu0 0
    %847 = vmatpush1.bf16.msra.mxu0 %v627
    %848 = vmatprep.mubr.bf16.mxu0 %v291
    %849 = vmatmul.mubr.bf16.gmra.mrb[0].mxu0 %v290
    %v850 = vpop.f32.mrb[0].mxu0
    %v851 = vadd.f32 %v728, %v850
    %v852 = vpop.f32.mrb[0].mxu0
    %v853 = vpop.f32.mrb[0].mxu0
    %v854 = vpop.f32.mrb[0].mxu0
    %855 = vdwg.mxu0
    %vm856 = vcmask 1040384
    %v857 = vsel %vm856, %v769, -inf
    %858 = vmax.xlane.f32.xlu0 %v857
    %v859 = vpop.xlane.xlu0 %858
    %v860 = vsub.f32 %v769, %v859
    %v861 = vmul.f32 %v860, 1.442695
    %v862 = vpow.pop %v861
    %v863 = vsel %vm856, %v862, 0.0
    %864 = vadd.xlane.f32.xlu0 %v863
    %v865 = vpop.xlane.xlu0 %864
    %v866 = vrcp.pop %v865
    %v867 = vmul.f32 %v862, %v866
    %868 = vmatprep.subr.mxu0 0.0
    %869 = vmatpush1.msra.mxu0 %v271
    %870 = vmatprep.subr.mxu0 0.0
    %871 = vmatpush1.msra.mxu0 %v272
    %872 = vmatprep.subr.mxu0 0.0
    %873 = vmatpush1.msra.mxu0 %v273
    %874 = vmatprep.subr.mxu0 0.0
    %875 = vmatpush1.msra.mxu0 %v274
    %876 = vmatprep.subr.mxu0 0.0
    %877 = vmatpush1.msra.mxu0 %v275
    %878 = vmatprep.subr.mxu0 0.0
    %879 = vmatpush1.msra.mxu0 %v276
    %880 = vmatprep.subr.mxu0 0.0
    %881 = vmatpush1.msra.mxu0 %v277
    %882 = vmatprep.subr.mxu0 0.0
    %883 = vmatpush1.msra.mxu0 %v278
    %884 = vmatprep.subr.mxu0 0.0
    %885 = vmatpush1.msra.mxu0 %v279
    %886 = vmatprep.subr.mxu0 0.0
    %887 = vmatpush1.msra.mxu0 %v280
    %888 = vmatprep.subr.mxu0 0.0
    %889 = vmatpush1.msra.mxu0 %v281
    %890 = vmatprep.subr.mxu0 0.0
    %891 = vmatpush1.msra.mxu0 %v282
    %892 = vmatprep.subr.mxu0 0.0
    %893 = vmatpush1.msra.mxu0 %v283
    %894 = vmatprep.subr.mxu0 0.0
    %895 = vmatpush1.msra.mxu0 %v284
    %896 = vmatprep.subr.mxu0 0.0
    %897 = vmatpush1.msra.mxu0 %v285
    %898 = vmatprep.subr.mxu0 0.0
    %899 = vmatpush1.msra.mxu0 %v286
    %900 = vmatprep.subr.mxu0 0.0
    %901 = vmatpush1.msra.mxu0 0.0
    %902 = vmatprep.subr.mxu0 0.0
    %903 = vmatpush1.msra.mxu0 0.0
    %904 = vmatprep.subr.mxu0 0.0
    %905 = vmatpush1.msra.mxu0 0.0
    %906 = vmatprep.subr.mxu0 0.0
    %907 = vmatpush1.msra.mxu0 0.0
    %908 = vmatprep.subr.mxu0 0.0
    %909 = vmatpush1.msra.mxu0 0.0
    %910 = vmatprep.subr.mxu0 0.0
    %911 = vmatpush1.msra.mxu0 0.0
    %912 = vmatprep.subr.mxu0 0.0
    %913 = vmatpush1.msra.mxu0 0.0
    %914 = vmatprep.subr.mxu0 0.0
    %915 = vmatpush1.msra.mxu0 0.0
    %916 = vmatprep.subr.mxu0 0.0
    %917 = vmatpush1.msra.mxu0 0.0
    %918 = vmatprep.subr.mxu0 0.0
    %919 = vmatpush1.msra.mxu0 0.0
    %920 = vmatprep.subr.mxu0 0.0
    %921 = vmatpush1.msra.mxu0 0.0
    %922 = vmatprep.subr.mxu0 0.0
    %923 = vmatpush1.msra.mxu0 0.0
    %924 = vmatprep.subr.mxu0 0.0
    %925 = vmatpush1.msra.mxu0 0.0
    %926 = vmatprep.subr.mxu0 0.0
    %927 = vmatpush1.msra.mxu0 0.0
    %928 = vmatprep.subr.mxu0 0.0
    %929 = vmatpush1.msra.mxu0 0.0
    %930 = vmatprep.subr.mxu0 0.0
    %931 = vmatpush1.msra.mxu0 0.0
    %932 = vmatprep.mubr.f32.mxu0 0.0
    %933 = vmatmul.mubr.f32.gmra.mrb[0].mxu0 %v867
    %v934 = vpop.f32.mrb[0].mxu0
    %v935 = vadd.f32 0.0, %v934
    %v936 = vpop.f32.mrb[0].mxu0
    %937 = vdwg.mxu0
    %v938 = vpack.c.bf16 %v935, %v935
    %v955 = vunpack.c.l.b16 %v207
    %v956 = vunpack.c.l.b16 %v208
    %v957 = vunpack.c.l.b16 %v209
    %v958 = vunpack.c.l.b16 %v210
    %v959 = vunpack.c.l.b16 %v211
    %v960 = vunpack.c.l.b16 %v212
    %v961 = vunpack.c.l.b16 %v213
    %v962 = vunpack.c.l.b16 %v214
    %v963 = vunpack.c.l.b16 %v215
    %v964 = vunpack.c.l.b16 %v216
    %v965 = vunpack.c.l.b16 %v217
    %v966 = vunpack.c.l.b16 %v218
    %v967 = vunpack.c.l.b16 %v219
    %v968 = vunpack.c.l.b16 %v220
    %v969 = vunpack.c.l.b16 %v221
    %v970 = vunpack.c.l.b16 %v222
    %v971 = vpack.c.b16 %v956, %v955
    %v972 = vpack.c.b16 %v958, %v957
    %v973 = vpack.c.b16 %v960, %v959
    %v974 = vpack.c.b16 %v962, %v961
    %v975 = vpack.c.b16 %v964, %v963
    %v976 = vpack.c.b16 %v966, %v965
    %v977 = vpack.c.b16 %v968, %v967
    %v978 = vpack.c.b16 %v970, %v969
    %987 = vmatprep.subr.bf16.mxu0 0
    %988 = vmatpush1.bf16.msra.mxu0 %v971
    %989 = vmatprep.subr.bf16.mxu0 0
    %990 = vmatpush1.bf16.msra.mxu0 %v972
    %991 = vmatprep.subr.bf16.mxu0 0
    %992 = vmatpush1.bf16.msra.mxu0 %v973
    %993 = vmatprep.subr.bf16.mxu0 0
    %994 = vmatpush1.bf16.msra.mxu0 %v974
    %995 = vmatprep.subr.bf16.mxu0 0
    %996 = vmatpush1.bf16.msra.mxu0 %v975
    %997 = vmatprep.subr.bf16.mxu0 0
    %998 = vmatpush1.bf16.msra.mxu0 %v976
    %999 = vmatprep.subr.bf16.mxu0 0
    %1000 = vmatpush1.bf16.msra.mxu0 %v977
    %1001 = vmatprep.subr.bf16.mxu0 0
    %1002 = vmatpush1.bf16.msra.mxu0 %v978
    %1003 = vmatprep.subr.bf16.mxu0 0
    %1004 = vmatpush1.bf16.msra.mxu0 0
    %1005 = vmatprep.subr.bf16.mxu0 0
    %1006 = vmatpush1.bf16.msra.mxu0 0
    %1007 = vmatprep.subr.bf16.mxu0 0
    %1008 = vmatpush1.bf16.msra.mxu0 0
    %1009 = vmatprep.subr.bf16.mxu0 0
    %1010 = vmatpush1.bf16.msra.mxu0 0
    %1011 = vmatprep.subr.bf16.mxu0 0
    %1012 = vmatpush1.bf16.msra.mxu0 0
    %1013 = vmatprep.subr.bf16.mxu0 0
    %1014 = vmatpush1.bf16.msra.mxu0 0
    %1015 = vmatprep.subr.bf16.mxu0 0
    %1016 = vmatpush1.bf16.msra.mxu0 0
    %1017 = vmatprep.subr.bf16.mxu0 0
    %1018 = vmatpush1.bf16.msra.mxu0 0
    %1019 = vmatprep.mubr.bf16.mxu0 0
    %1020 = vmatmul.mubr.bf16.gmra.mrb[0].mxu0 %v938
    %v1021 = vpop.f32.mrb[0].mxu0
    %v1022 = vadd.f32 0.0, %v1021
    %v1023 = vpop.f32.mrb[0].mxu0
    %v1024 = vpop.f32.mrb[0].mxu0
    %v1025 = vpop.f32.mrb[0].mxu0
    %1026 = vdwg.mxu0
    %v1027 = vadd.f32 %v771, %v1022
    %v1028 = vmax.f32 %v1027, 0.0
    %v1029 = vpack.c.bf16 %v1028, %v1028
    %v1062 = vunpack.c.l.b16 %v223
    %v1063 = vunpack.c.h.b16 %v223
    %v1064 = vunpack.c.l.b16 %v224
    %v1065 = vunpack.c.l.b16 %v225
    %v1066 = vunpack.c.h.b16 %v225
    %v1067 = vunpack.c.l.b16 %v226
    %v1068 = vunpack.c.l.b16 %v227
    %v1069 = vunpack.c.h.b16 %v227
    %v1070 = vunpack.c.l.b16 %v228
    %v1071 = vunpack.c.l.b16 %v229
    %v1072 = vunpack.c.h.b16 %v229
    %v1073 = vunpack.c.l.b16 %v230
    %v1074 = vunpack.c.l.b16 %v231
    %v1075 = vunpack.c.h.b16 %v231
    %v1076 = vunpack.c.l.b16 %v232
    %v1077 = vunpack.c.l.b16 %v233
    %v1078 = vunpack.c.h.b16 %v233
    %v1079 = vunpack.c.l.b16 %v234
    %v1080 = vunpack.c.l.b16 %v235
    %v1081 = vunpack.c.h.b16 %v235
    %v1082 = vunpack.c.l.b16 %v236
    %v1083 = vunpack.c.l.b16 %v237
    %v1084 = vunpack.c.h.b16 %v237
    %v1085 = vunpack.c.l.b16 %v238
    %v1086 = vunpack.c.l.b16 %v239
    %v1087 = vunpack.c.h.b16 %v239
    %v1088 = vunpack.c.l.b16 %v240
    %v1089 = vunpack.c.l.b16 %v241
    %v1090 = vunpack.c.h.b16 %v241
    %v1091 = vunpack.c.l.b16 %v242
    %v1092 = vunpack.c.l.b16 %v243
    %v1093 = vunpack.c.h.b16 %v243
    %v1094 = vunpack.c.l.b16 %v244
    %v1095 = vunpack.c.l.b16 %v245
    %v1096 = vunpack.c.h.b16 %v245
    %v1097 = vunpack.c.l.b16 %v246
    %v1098 = vunpack.c.l.b16 %v247
    %v1099 = vunpack.c.h.b16 %v247
    %v1100 = vunpack.c.l.b16 %v248
    %v1101 = vunpack.c.l.b16 %v249
    %v1102 = vunpack.c.h.b16 %v249
    %v1103 = vunpack.c.l.b16 %v250
    %v1104 = vunpack.c.l.b16 %v251
    %v1105 = vunpack.c.h.b16 %v251
    %v1106 = vunpack.c.l.b16 %v252
    %v1107 = vunpack.c.l.b16 %v253
    %v1108 = vunpack.c.h.b16 %v253
    %v1109 = vunpack.c.l.b16 %v254
    %v1110 = vpack.c.b16 %v1065, %v1062
    %v1111 = vpack.c.b16 %v1066, %v1063
    %v1112 = vpack.c.b16 %v1067, %v1064
    %v1113 = vpack.c.b16 %v1071, %v1068
    %v1114 = vpack.c.b16 %v1072, %v1069
    %v1115 = vpack.c.b16 %v1073, %v1070
    %v1116 = vpack.c.b16 %v1077, %v1074
    %v1117 = vpack.c.b16 %v1078, %v1075
    %v1118 = vpack.c.b16 %v1079, %v1076
    %v1119 = vpack.c.b16 %v1083, %v1080
    %v1120 = vpack.c.b16 %v1084, %v1081
    %v1121 = vpack.c.b16 %v1085, %v1082
    %v1122 = vpack.c.b16 %v1089, %v1086
    %v1123 = vpack.c.b16 %v1090, %v1087
    %v1124 = vpack.c.b16 %v1091, %v1088
    %v1125 = vpack.c.b16 %v1095, %v1092
    %v1126 = vpack.c.b16 %v1096, %v1093
    %v1127 = vpack.c.b16 %v1097, %v1094
    %v1128 = vpack.c.b16 %v1101, %v1098
    %v1129 = vpack.c.b16 %v1102, %v1099
    %v1130 = vpack.c.b16 %v1103, %v1100
    %v1131 = vpack.c.b16 %v1107, %v1104
    %v1132 = vpack.c.b16 %v1108, %v1105
    %v1133 = vpack.c.b16 %v1109, %v1106
    %v1158 = vlaneseq
    %v1159 = vshrl.u32 %v1158, 7
    %v1160 = vsub.s32 5, %v1159
    %v1161 = vrot.slane %v287, %v1160
    %v1162 = vlaneseq
    %v1163 = vshrl.u32 %v1162, 7
    %v1164 = vsub.s32 6, %v1163
    %v1165 = vrot.slane %v287, %v1164
    %v1166 = vlaneseq
    %v1167 = vshrl.u32 %v1166, 7
    %v1168 = vsub.s32 7, %v1167
    %v1169 = vrot.slane %v287, %v1168
    %1173 = vmatprep.subr.bf16.mxu0 %v1111
    %1174 = vmatpush1.bf16.msra.mxu0 %v1110
    %1175 = vmatprep.subr.bf16.mxu0 %v1114
    %1176 = vmatpush1.bf16.msra.mxu0 %v1113
    %1177 = vmatprep.subr.bf16.mxu0 %v1117
    %1178 = vmatpush1.bf16.msra.mxu0 %v1116
    %1179 = vmatprep.subr.bf16.mxu0 %v1120
    %1180 = vmatpush1.bf16.msra.mxu0 %v1119
    %1181 = vmatprep.subr.bf16.mxu0 %v1123
    %1182 = vmatpush1.bf16.msra.mxu0 %v1122
    %1183 = vmatprep.subr.bf16.mxu0 %v1126
    %1184 = vmatpush1.bf16.msra.mxu0 %v1125
    %1185 = vmatprep.subr.bf16.mxu0 %v1129
    %1186 = vmatpush1.bf16.msra.mxu0 %v1128
    %1187 = vmatprep.subr.bf16.mxu0 %v1132
    %1188 = vmatpush1.bf16.msra.mxu0 %v1131
    %1189 = vmatprep.subr.bf16.mxu0 0
    %1190 = vmatpush1.bf16.msra.mxu0 0
    %1191 = vmatprep.subr.bf16.mxu0 0
    %1192 = vmatpush1.bf16.msra.mxu0 0
    %1193 = vmatprep.subr.bf16.mxu0 0
    %1194 = vmatpush1.bf16.msra.mxu0 0
    %1195 = vmatprep.subr.bf16.mxu0 0
    %1196 = vmatpush1.bf16.msra.mxu0 0
    %1197 = vmatprep.subr.bf16.mxu0 0
    %1198 = vmatpush1.bf16.msra.mxu0 0
    %1199 = vmatprep.subr.bf16.mxu0 0
    %1200 = vmatpush1.bf16.msra.mxu0 0
    %1201 = vmatprep.subr.bf16.mxu0 0
    %1202 = vmatpush1.bf16.msra.mxu0 0
    %1203 = vmatprep.subr.bf16.mxu0 0
    %1204 = vmatpush1.bf16.msra.mxu0 0
    %1205 = vmatprep.mubr.bf16.mxu0 0
    %1206 = vmatmul.mubr.bf16.gmra.mrb[0].mxu0 %v1029
    %v1207 = vpop.f32.mrb[0].mxu0
    %v1208 = vadd.f32 %v1161, %v1207
    %v1209 = vpop.f32.mrb[0].mxu0
    %v1210 = vadd.f32 %v1165, %v1209
    %v1211 = vpop.f32.mrb[0].mxu0
    %v1212 = vpop.f32.mrb[0].mxu0
    %1213 = vdwg.mxu0
    %1214 = vmatprep.subr.bf16.mxu0 0
    %1215 = vmatpush1.bf16.msra.mxu0 %v1112
    %1216 = vmatprep.subr.bf16.mxu0 0
    %1217 = vmatpush1.bf16.msra.mxu0 %v1115
    %1218 = vmatprep.subr.bf16.mxu0 0
    %1219 = vmatpush1.bf16.msra.mxu0 %v1118
    %1220 = vmatprep.subr.bf16.mxu0 0
    %1221 = vmatpush1.bf16.msra.mxu0 %v1121
    %1222 = vmatprep.subr.bf16.mxu0 0
    %1223 = vmatpush1.bf16.msra.mxu0 %v1124
    %1224 = vmatprep.subr.bf16.mxu0 0
    %1225 = vmatpush1.bf16.msra.mxu0 %v1127
    %1226 = vmatprep.subr.bf16.mxu0 0
    %1227 = vmatpush1.bf16.msra.mxu0 %v1130
    %1228 = vmatprep.subr.bf16.mxu0 0
    %1229 = vmatpush1.bf16.msra.mxu0 %v1133
    %1230 = vmatprep.subr.bf16.mxu0 0
    %1231 = vmatpush1.bf16.msra.mxu0 0
    %1232 = vmatprep.subr.bf16.mxu0 0
    %1233 = vmatpush1.bf16.msra.mxu0 0
    %1234 = vmatprep.subr.bf16.mxu0 0
    %1235 = vmatpush1.bf16.msra.mxu0 0
    %1236 = vmatprep.subr.bf16.mxu0 0
    %1237 = vmatpush1.bf16.msra.mxu0 0
    %1238 = vmatprep.subr.bf16.mxu0 0
    %1239 = vmatpush1.bf16.msra.mxu0 0
    %1240 = vmatprep.subr.bf16.mxu0 0
    %1241 = vmatpush1.bf16.msra.mxu0 0
    %1242 = vmatprep.subr.bf16.mxu0 0
    %1243 = vmatpush1.bf16.msra.mxu0 0
    %1244 = vmatprep.subr.bf16.mxu0 0
    %1245 = vmatpush1.bf16.msra.mxu0 0
    %1246 = vmatprep.mubr.bf16.mxu0 0
    %1247 = vmatmul.mubr.bf16.gmra.mrb[0].mxu0 %v1029
    %v1248 = vpop.f32.mrb[0].mxu0
    %v1249 = vadd.f32 %v1169, %v1248
    %v1250 = vpop.f32.mrb[0].mxu0
    %v1251 = vpop.f32.mrb[0].mxu0
    %v1252 = vpop.f32.mrb[0].mxu0
    %1253 = vdwg.mxu0
    %v1254 = vadd.f32 %v1208, %v810
    %v1255 = vxor.u32 %v1254, 2147483648
    %v1256 = vmul.f32 %v1255, 1.442695
    %v1257 = vpow.pop %v1256
    %v1258 = vadd.f32 %v1257, 1.0
    %v1259 = vrcp.pop %v1258
    %v1260 = vmul.f32 1.0, %v1259
    %v1261 = vadd.f32 %v1210, %v812
    %v1262 = vxor.u32 %v1261, 2147483648
    %v1263 = vmul.f32 %v1262, 1.442695
    %v1264 = vpow.pop %v1263
    %v1265 = vadd.f32 %v1264, 1.0
    %v1266 = vrcp.pop %v1265
    %v1267 = vmul.f32 1.0, %v1266
    %v1268 = vmul.f32 %v1260, %v851
    %v1269 = vadd.f32 %v1249, %v1268
    %v1270 = vtanh.pop %v1269
    %v1271 = vsub.f32 1.0, %v1267
    %v1272 = vmul.f32 %v1271, %v1270
    %v1273 = vmul.f32 %v1267, %v289
    %v1274 = vadd.f32 %v1272, %v1273
    %v1275 = vpack.c.bf16 %v1274, %v1274
    %v1292 = vunpack.c.l.b16 %v255
    %v1293 = vunpack.c.l.b16 %v256
    %v1294 = vunpack.c.l.b16 %v257
    %v1295 = vunpack.c.l.b16 %v258
    %v1296 = vunpack.c.l.b16 %v259
    %v1297 = vunpack.c.l.b16 %v260
    %v1298 = vunpack.c.l.b16 %v261
    %v1299 = vunpack.c.l.b16 %v262
    %v1300 = vunpack.c.l.b16 %v263
    %v1301 = vunpack.c.l.b16 %v264
    %v1302 = vunpack.c.l.b16 %v265
    %v1303 = vunpack.c.l.b16 %v266
    %v1304 = vunpack.c.l.b16 %v267
    %v1305 = vunpack.c.l.b16 %v268
    %v1306 = vunpack.c.l.b16 %v269
    %v1307 = vunpack.c.l.b16 %v270
    %v1308 = vpack.c.b16 %v1293, %v1292
    %v1309 = vpack.c.b16 %v1295, %v1294
    %v1310 = vpack.c.b16 %v1297, %v1296
    %v1311 = vpack.c.b16 %v1299, %v1298
    %v1312 = vpack.c.b16 %v1301, %v1300
    %v1313 = vpack.c.b16 %v1303, %v1302
    %v1314 = vpack.c.b16 %v1305, %v1304
    %v1315 = vpack.c.b16 %v1307, %v1306
    %1324 = vmatprep.subr.bf16.mxu0 0
    %1325 = vmatpush1.bf16.msra.mxu0 %v1308
    %1326 = vmatprep.subr.bf16.mxu0 0
    %1327 = vmatpush1.bf16.msra.mxu0 %v1309
    %1328 = vmatprep.subr.bf16.mxu0 0
    %1329 = vmatpush1.bf16.msra.mxu0 %v1310
    %1330 = vmatprep.subr.bf16.mxu0 0
    %1331 = vmatpush1.bf16.msra.mxu0 %v1311
    %1332 = vmatprep.subr.bf16.mxu0 0
    %1333 = vmatpush1.bf16.msra.mxu0 %v1312
    %1334 = vmatprep.subr.bf16.mxu0 0
    %1335 = vmatpush1.bf16.msra.mxu0 %v1313
    %1336 = vmatprep.subr.bf16.mxu0 0
    %1337 = vmatpush1.bf16.msra.mxu0 %v1314
    %1338 = vmatprep.subr.bf16.mxu0 0
    %1339 = vmatpush1.bf16.msra.mxu0 %v1315
    %1340 = vmatprep.subr.bf16.mxu0 0
    %1341 = vmatpush1.bf16.msra.mxu0 0
    %1342 = vmatprep.subr.bf16.mxu0 0
    %1343 = vmatpush1.bf16.msra.mxu0 0
    %1344 = vmatprep.subr.bf16.mxu0 0
    %1345 = vmatpush1.bf16.msra.mxu0 0
    %1346 = vmatprep.subr.bf16.mxu0 0
    %1347 = vmatpush1.bf16.msra.mxu0 0
    %1348 = vmatprep.subr.bf16.mxu0 0
    %1349 = vmatpush1.bf16.msra.mxu0 0
    %1350 = vmatprep.subr.bf16.mxu0 0
    %1351 = vmatpush1.bf16.msra.mxu0 0
    %1352 = vmatprep.subr.bf16.mxu0 0
    %1353 = vmatpush1.bf16.msra.mxu0 0
    %1354 = vmatprep.subr.bf16.mxu0 0
    %1355 = vmatpush1.bf16.msra.mxu0 0
    %1356 = vmatprep.mubr.bf16.mxu0 0
    %1357 = vmatmul.mubr.bf16.gmra.mrb[0].mxu0 %v1275
    %v1358 = vpop.f32.mrb[0].mxu0
    %v1359 = vadd.f32 %v288, %v1358
    %v1360 = vpop.f32.mrb[0].mxu0
    %v1361 = vpop.f32.mrb[0].mxu0
    %v1362 = vpop.f32.mrb[0].mxu0
    %1363 = vdwg.mxu0
    %v1364 = vsel %vm856, %v1359, -inf
    %1365 = vmax.xlane.f32.xlu0 %v1364
    %v1366 = vpop.xlane.xlu0 %1365
    %v1367 = vsub.f32 %v1359, %v1366
    %v1368 = vmul.f32 %v1367, 1.442695
    %v1369 = vpow.pop %v1368
    %v1370 = vsel %vm856, %v1369, 0.0
    %1371 = vadd.xlane.f32.xlu0 %v1370
    %v1372 = vpop.xlane.xlu0 %1371
    %v1373 = vlog2.pop %v1372
    %v1374 = vmul.f32 %v1373, 0.6931472
    %v1375 = vsub.f32 %v1367, %v1374
    %v1376 = vlaneseq
    %vm1377 = vcmp.ge.s32.totalorder %v1376, 0
    %vm1378 = vcmp.lt.s32.totalorder %v1376, 128
    %vm1379 = vmand %vm1377, %vm1378
    %1380 = vst.msk [vmem:[#allocation13] sm:$0x1] %vm1379, %v1375
    %1381 = vst.msk [vmem:[#allocation13 + $0x1] sm:$0x1] %vm1379, %v1274
    %1382 = vst.msk [vmem:[#allocation13 + $0x2] sm:$0x1] %vm1379, %v867
    // Predicated region
    $region58: #{tpu_custom_call.1} parent=1 // pred_check
      _
    $region59: #{tpu_custom_call.1} parent=1 // pred_check_branch
      %1384 = sbr.rel (0) target = $region61
    $region60: #{tpu_custom_call.1} parent=1 // pred_region
      %s1386 = ssub.s32 48, 48
      %1387 = vsyncadd [#allocation4], %s1386
      %s1389 = sshll.u32 [#allocation13], 4
      %s1390 = int_to_ptr.vmem [resolvable:$true] %s1389
      %1392 = dma.vmem_to_hbm [thread:$0]  %s1390, 48, %s8, [#allocation4]
    $region61: #{tpu_custom_call.1} parent=1 // pred_fallthru
      _
    // Predicated region
    $region62: #{tpu_custom_call.1} parent=1 // pred_check
      _
    $region63: #{tpu_custom_call.1} parent=1 // pred_check_branch
      %1394 = sbr.rel (0) target = $region65
    $region64: #{tpu_custom_call.1} parent=1 // pred_region
      %1395 = dma.done [#allocation4], 48
    $region65: #{tpu_custom_call.1} parent=1 // pred_fallthru
      _
    %1396 = vsyncpa [#allocation3], 1
    %1397 = vsyncpa [#allocation6], 1
    %1398 = vsyncpa [#allocation9], 1
    %1399 = vsyncpa [#allocation12], 1
    %1400 = vsyncpa [#allocation4], 1

</llo_original>
